<compile_context>
chip_gen: v7x
topology: tpu7x:2x2x1
jax: 0.10.0
libtpu: 0.0.40
codegen_flags: <defaults>
</compile_context>

<pallas_src>
import math
import functools

import jax
import jax.numpy as jnp
from jax import lax
from jax.experimental import pallas as pl
from jax.experimental.pallas import tpu as pltpu


# ----------------------------------------------------------------------------
# Fused kernel: one batch element -> QKV projections (all heads), per-head
# attention, per-head output projection accumulated into an (S, d_in) f32 acc.
# ----------------------------------------------------------------------------
def _mha_fused_kernel(q_ref, k_ref, v_ref, wqkv_ref, bqkv_ref, wo_ref, bo_ref,
                      o_ref, *, num_heads, d_out, compute_dtype):
    # q_ref/k_ref/v_ref: (1, S, d_in); wqkv_ref: (3, d_in, H*d_out);
    # bqkv_ref: (3, 1, H*d_out); wo_ref: (H*d_out, d_in); bo_ref: (1, d_in).
    f32 = jnp.float32
    cd = compute_dtype

    def mm(a, b):                      # MXU matmul, f32 accumulation
        return jnp.dot(a, b, preferred_element_type=f32)

    def mm_nt(a, b):                   # (M,K) x (N,K) -> (M,N); contract last dims,
        return lax.dot_general(        # no transposed copy of b is materialized.
            a, b, (((1,), (1,)), ((), ())), preferred_element_type=f32)

    # Cast inputs once (no-op in the fp32 path).
    x_q = q_ref[0].astype(cd)          # (S, d_in)
    x_k = k_ref[0].astype(cd)
    x_v = v_ref[0].astype(cd)

    # Fused projections: one lane-dense matmul per stream, N = H*d_out.
    # 1/sqrt(d) is already folded into wqkv[0]/bqkv[0] at pack time.
    q_all = (mm(x_q, wqkv_ref[0].astype(cd)) + bqkv_ref[0]).astype(cd)   # (S, H*d_out)
    k_all = (mm(x_k, wqkv_ref[1].astype(cd)) + bqkv_ref[1]).astype(cd)
    v_all = (mm(x_v, wqkv_ref[2].astype(cd)) + bqkv_ref[2]).astype(cd)

    wo_c = wo_ref[...].astype(cd)      # (H*d_out, d_in), cast once
    S = x_q.shape[0]
    d_in = wo_c.shape[1]

    # Output-projection accumulator: Wo folded into the head loop -> no concat,
    # no intermediate (S, H*d_out) head-output slab kept live.
    acc = jnp.zeros((S, d_in), f32)

    # TODO(synk): for large H switch to lax.fori_loop(..., unroll=<small>) to bound
    #             live ranges instead of a fully unrolled static Python loop.
    for h in range(num_heads):
        sl = slice(h * d_out, (h + 1) * d_out)
        q_h = q_all[:, sl]                                  # (S, d_out)
        k_h = k_all[:, sl]
        v_h = v_all[:, sl]

        scores = mm_nt(q_h, k_h)                            # (S, S) f32 (scale folded in q)
        m = jnp.max(scores, axis=-1, keepdims=True)
        e = jnp.exp(scores - m)
        attn = e / jnp.sum(e, axis=-1, keepdims=True)       # exact softmax (fp32)

        ctx = mm(attn.astype(cd), v_h)                      # (S, d_out) f32
        acc = acc + mm(ctx.astype(cd), wo_c[sl, :])         # per-head output projection

    o_ref[0] = (acc + bo_ref[...]).astype(o_ref.dtype)      # (S, d_in)


def _vmem_limit_bytes(S, d_in, HD):
    """Rough per-step VMEM footprint (f32) with double-buffering + headroom."""
    f32b = 4
    weights = (3 * d_in * HD + 3 * HD + HD * d_in + d_in) * f32b
    io_blocks = 4 * S * d_in * f32b                       # q, k, v, out blocks
    work = (3 * S * HD + 2 * S * S + S * d_in) * f32b     # projections, scores/exp, acc
    est = 4 * (2 * weights + 2 * io_blocks + work)        # 2x buffering, 2x headroom
    return int(min(max(est, 8 * 1024 * 1024), 48 * 1024 * 1024))


def multi_head_attention(query, key, value, fused, num_heads,
                         compute_dtype=jnp.float32):
    """query/key/value: (B, S, d_in) float32 -> (B, S, d_in) float32."""
    wqkv, bqkv, wo, bo = fused["wqkv"], fused["bqkv"], fused["wo"], fused["bo"]
    B, S, d_in = query.shape
    _, _, HD = wqkv.shape
    d_out = HD // num_heads

    kernel = functools.partial(
        _mha_fused_kernel, num_heads=num_heads, d_out=d_out,
        compute_dtype=compute_dtype)

    return pl.pallas_call(
        kernel,
        out_shape=jax.ShapeDtypeStruct((B, S, d_in), jnp.float32),
        grid=(B,),
        in_specs=[
            pl.BlockSpec((1, S, d_in), lambda b: (b, 0, 0)),     # query
            pl.BlockSpec((1, S, d_in), lambda b: (b, 0, 0)),     # key
            pl.BlockSpec((1, S, d_in), lambda b: (b, 0, 0)),     # value
            pl.BlockSpec((3, d_in, HD), lambda b: (0, 0, 0)),    # Wq/Wk/Wv stacked (resident)
            pl.BlockSpec((3, 1, HD),    lambda b: (0, 0, 0)),    # bq/bk/bv stacked (resident)
            pl.BlockSpec((HD, d_in),    lambda b: (0, 0)),       # Wo (resident)
            pl.BlockSpec((1, d_in),     lambda b: (0, 0)),       # bo (resident)
        ],
        out_specs=pl.BlockSpec((1, S, d_in), lambda b: (b, 0, 0)),
        compiler_params=pltpu.CompilerParams(
            dimension_semantics=("parallel",),
            vmem_limit_bytes=_vmem_limit_bytes(S, d_in, HD)),
    )(query, key, value, wqkv, bqkv, wo, bo)


# ----------------------------------------------------------------------------
# Parameter init (per-head, mirrors the torch module), packing to the fused
# kernel layout (scale folded into Wq/bq), and a pure-JAX reference.
# ----------------------------------------------------------------------------
def init_params(key, d_in, d_out, num_heads):
    ks = jax.random.split(key, 8)

    def xavier(k, fan_in, fan_out, shape):
        lim = math.sqrt(6.0 / (fan_in + fan_out))
        return jax.random.uniform(k, shape, jnp.float32, -lim, lim)

    def bias(k, fan_in, shape):
        lim = 1.0 / math.sqrt(fan_in)
        return jax.random.uniform(k, shape, jnp.float32, -lim, lim)

    H = num_heads
    return dict(
        wq=xavier(ks[0], d_in, d_out, (H, d_in, d_out)),
        bq=bias(ks[1], d_in, (H, 1, d_out)),
        wk=xavier(ks[2], d_in, d_out, (H, d_in, d_out)),
        bk=bias(ks[3], d_in, (H, 1, d_out)),
        wv=xavier(ks[4], d_in, d_out, (H, d_in, d_out)),
        bv=bias(ks[5], d_in, (H, 1, d_out)),
        wo=xavier(ks[6], H * d_out, d_in, (H * d_out, d_in)),
        bo=bias(ks[7], H * d_out, (1, d_in)),
    )


def pack_params(params):
    """(H, d_in, d_out) per-head weights -> fused (3, d_in, H*d_out) layout.
    The 1/sqrt(d_qk) attention scale is folded into Wq/bq here (one-time)."""
    H, d_in, d_out = params["wq"].shape
    scale = 1.0 / math.sqrt(d_out)

    def fuse_w(w):   # (H, d_in, d_out) -> (d_in, H*d_out), head-major along last dim
        return jnp.transpose(w, (1, 0, 2)).reshape(d_in, H * d_out)

    def fuse_b(b):   # (H, 1, d_out) -> (1, H*d_out)
        return b.reshape(1, H * d_out)

    wqkv = jnp.stack([fuse_w(params["wq"]) * scale,
                      fuse_w(params["wk"]),
                      fuse_w(params["wv"])])
    bqkv = jnp.stack([fuse_b(params["bq"]) * scale,
                      fuse_b(params["bk"]),
                      fuse_b(params["bv"])])
    return dict(wqkv=wqkv, bqkv=bqkv, wo=params["wo"], bo=params["bo"])


def reference(query, key, value, params):
    """Pure-JAX reference (highest matmul precision so it is accurate on TPU hardware)."""
    H, d_in, d_out = params["wq"].shape
    scale = 1.0 / math.sqrt(d_out)
    hi = lax.Precision.HIGHEST
    heads = []
    for h in range(H):
        q = jnp.einsum("bsd,de->bse", query, params["wq"][h], precision=hi) + params["bq"][h]
        k = jnp.einsum("bsd,de->bse", key, params["wk"][h], precision=hi) + params["bk"][h]
        v = jnp.einsum("bsd,de->bse", value, params["wv"][h], precision=hi) + params["bv"][h]
        s = jnp.einsum("bqd,bkd->bqk", q, k, precision=hi) * scale
        a = jax.nn.softmax(s, axis=-1)
        heads.append(jnp.einsum("bqk,bkd->bqd", a, v, precision=hi))
    cat = jnp.concatenate(heads, axis=-1)
    return jnp.einsum("bsd,de->bse", cat, params["wo"], precision=hi) + params["bo"]


if __name__ == "__main__":
    B, S, d_in, d_out, H = 2, 8, 32, 16, 4

    key = jax.random.PRNGKey(0)
    kq, kk, kv, kp = jax.random.split(key, 4)
    query = jax.random.normal(kq, (B, S, d_in), jnp.float32)
    key_t = jax.random.normal(kk, (B, S, d_in), jnp.float32)
    value = jax.random.normal(kv, (B, S, d_in), jnp.float32)
    params = init_params(kp, d_in, d_out, H)
    fused = pack_params(params)

    ref = jax.block_until_ready(reference(query, key_t, value, params))

    # fp32-operand path: exact softmax divide -> tight agreement with the reference.
    out = multi_head_attention(query, key_t, value, fused, H)
    out = jax.block_until_ready(out)
    assert out.shape == (B, S, d_in)
    assert jnp.allclose(out, ref, atol=2e-3, rtol=2e-3), "fp32 kernel mismatch vs reference"

    # bf16 MXU-operand path (v5e/v6e/v7x optimization): f32 accumulation + f32 softmax.
    out_bf16 = multi_head_attention(query, key_t, value, fused, H,
                                    compute_dtype=jnp.bfloat16)
    out_bf16 = jax.block_until_ready(out_bf16)
    assert jnp.allclose(out_bf16, ref, atol=1e-1, rtol=1e-1), "bf16 kernel sanity mismatch"

    print("KERNEL_OK")
</pallas_src>

<mosaic_0001>
module attributes {stable_mosaic.version = 11 : i64} {
  func.func @_mha_fused_kernel(%arg0: i32, %arg1: memref<1x8x32xf32, #tpu.memory_space<vmem>>, %arg2: memref<1x8x32xf32, #tpu.memory_space<vmem>>, %arg3: memref<1x8x32xf32, #tpu.memory_space<vmem>>, %arg4: memref<3x32x64xf32, #tpu.memory_space<vmem>>, %arg5: memref<3x1x64xf32, #tpu.memory_space<vmem>>, %arg6: memref<64x32xf32, #tpu.memory_space<vmem>>, %arg7: memref<1x32xf32, #tpu.memory_space<vmem>>, %arg8: memref<1x8x32xf32, #tpu.memory_space<vmem>>) attributes {dimension_semantics = [#tpu.dimension_semantics<parallel>], iteration_bounds = array<i64: 2>, scalar_prefetch = 0 : i64, scratch_operands = 0 : i64, tpu.core_type = #tpu.core_type<tc>, window_params = [{transform_indices = @transform_0, window_bounds = array<i64: 1, 8, 32>}, {transform_indices = @transform_1, window_bounds = array<i64: 1, 8, 32>}, {transform_indices = @transform_2, window_bounds = array<i64: 1, 8, 32>}, {pipeline_mode = #tpu.pipeline_mode<synchronous>, transform_indices = @transform_3, window_bounds = array<i64: 3, 32, 64>}, {pipeline_mode = #tpu.pipeline_mode<synchronous>, transform_indices = @transform_4, window_bounds = array<i64: 3, 1, 64>}, {pipeline_mode = #tpu.pipeline_mode<synchronous>, transform_indices = @transform_5, window_bounds = array<i64: 64, 32>}, {pipeline_mode = #tpu.pipeline_mode<synchronous>, transform_indices = @transform_6, window_bounds = array<i64: 1, 32>}, {transform_indices = @transform_7, window_bounds = array<i64: 1, 8, 32>}]} {
    %c0 = arith.constant 0 : index
    %c0_0 = arith.constant 0 : index
    %c0_1 = arith.constant 0 : index
    %0 = vector.load %arg1[%c0, %c0_0, %c0_1] : memref<1x8x32xf32, #tpu.memory_space<vmem>>, vector<1x8x32xf32>
    %1 = vector.shape_cast %0 : vector<1x8x32xf32> to vector<8x32xf32>
    %c0_2 = arith.constant 0 : index
    %c0_3 = arith.constant 0 : index
    %c0_4 = arith.constant 0 : index
    %2 = vector.load %arg2[%c0_2, %c0_3, %c0_4] : memref<1x8x32xf32, #tpu.memory_space<vmem>>, vector<1x8x32xf32>
    %3 = vector.shape_cast %2 : vector<1x8x32xf32> to vector<8x32xf32>
    %c0_5 = arith.constant 0 : index
    %c0_6 = arith.constant 0 : index
    %c0_7 = arith.constant 0 : index
    %4 = vector.load %arg3[%c0_5, %c0_6, %c0_7] : memref<1x8x32xf32, #tpu.memory_space<vmem>>, vector<1x8x32xf32>
    %5 = vector.shape_cast %4 : vector<1x8x32xf32> to vector<8x32xf32>
    %c0_8 = arith.constant 0 : index
    %c0_9 = arith.constant 0 : index
    %c0_10 = arith.constant 0 : index
    %6 = vector.load %arg4[%c0_8, %c0_9, %c0_10] : memref<3x32x64xf32, #tpu.memory_space<vmem>>, vector<1x32x64xf32>
    %7 = vector.shape_cast %6 : vector<1x32x64xf32> to vector<32x64xf32>
    %cst = arith.constant dense<0.000000e+00> : vector<8x64xf32>
    %8 = tpu.matmul %1, %7, %cst {dimension_numbers = #tpu.dot_dimension_numbers<[1], [0], [0], [1], [0, 0, 1, 1], [], []>} : vector<8x32xf32>, vector<32x64xf32>, vector<8x64xf32> -> vector<8x64xf32>
    %c0_11 = arith.constant 0 : index
    %c0_12 = arith.constant 0 : index
    %c0_13 = arith.constant 0 : index
    %9 = vector.load %arg5[%c0_11, %c0_12, %c0_13] : memref<3x1x64xf32, #tpu.memory_space<vmem>>, vector<1x1x64xf32>
    %10 = vector.shape_cast %9 : vector<1x1x64xf32> to vector<1x64xf32>
    %11 = vector.broadcast %10 : vector<1x64xf32> to vector<8x64xf32>
    %12 = arith.addf %8, %11 : vector<8x64xf32>
    %c1 = arith.constant 1 : index
    %c0_14 = arith.constant 0 : index
    %c0_15 = arith.constant 0 : index
    %13 = vector.load %arg4[%c1, %c0_14, %c0_15] : memref<3x32x64xf32, #tpu.memory_space<vmem>>, vector<1x32x64xf32>
    %14 = vector.shape_cast %13 : vector<1x32x64xf32> to vector<32x64xf32>
    %cst_16 = arith.constant dense<0.000000e+00> : vector<8x64xf32>
    %15 = tpu.matmul %3, %14, %cst_16 {dimension_numbers = #tpu.dot_dimension_numbers<[1], [0], [0], [1], [0, 0, 1, 1], [], []>} : vector<8x32xf32>, vector<32x64xf32>, vector<8x64xf32> -> vector<8x64xf32>
    %c1_17 = arith.constant 1 : index
    %c0_18 = arith.constant 0 : index
    %c0_19 = arith.constant 0 : index
    %16 = vector.load %arg5[%c1_17, %c0_18, %c0_19] : memref<3x1x64xf32, #tpu.memory_space<vmem>>, vector<1x1x64xf32>
    %17 = vector.shape_cast %16 : vector<1x1x64xf32> to vector<1x64xf32>
    %18 = vector.broadcast %17 : vector<1x64xf32> to vector<8x64xf32>
    %19 = arith.addf %15, %18 : vector<8x64xf32>
    %c2 = arith.constant 2 : index
    %c0_20 = arith.constant 0 : index
    %c0_21 = arith.constant 0 : index
    %20 = vector.load %arg4[%c2, %c0_20, %c0_21] : memref<3x32x64xf32, #tpu.memory_space<vmem>>, vector<1x32x64xf32>
    %21 = vector.shape_cast %20 : vector<1x32x64xf32> to vector<32x64xf32>
    %cst_22 = arith.constant dense<0.000000e+00> : vector<8x64xf32>
    %22 = tpu.matmul %5, %21, %cst_22 {dimension_numbers = #tpu.dot_dimension_numbers<[1], [0], [0], [1], [0, 0, 1, 1], [], []>} : vector<8x32xf32>, vector<32x64xf32>, vector<8x64xf32> -> vector<8x64xf32>
    %c2_23 = arith.constant 2 : index
    %c0_24 = arith.constant 0 : index
    %c0_25 = arith.constant 0 : index
    %23 = vector.load %arg5[%c2_23, %c0_24, %c0_25] : memref<3x1x64xf32, #tpu.memory_space<vmem>>, vector<1x1x64xf32>
    %24 = vector.shape_cast %23 : vector<1x1x64xf32> to vector<1x64xf32>
    %25 = vector.broadcast %24 : vector<1x64xf32> to vector<8x64xf32>
    %26 = arith.addf %22, %25 : vector<8x64xf32>
    %c0_26 = arith.constant 0 : index
    %c0_27 = arith.constant 0 : index
    %27 = vector.load %arg6[%c0_26, %c0_27] : memref<64x32xf32, #tpu.memory_space<vmem>>, vector<64x32xf32>
    %cst_28 = arith.constant 0.000000e+00 : f32
    %28 = vector.broadcast %cst_28 : f32 to vector<8x32xf32>
    %29 = vector.extract_strided_slice %12 {offsets = [0, 0], sizes = [8, 16], strides = [1, 1]} : vector<8x64xf32> to vector<8x16xf32>
    %30 = vector.extract_strided_slice %19 {offsets = [0, 0], sizes = [8, 16], strides = [1, 1]} : vector<8x64xf32> to vector<8x16xf32>
    %31 = vector.extract_strided_slice %26 {offsets = [0, 0], sizes = [8, 16], strides = [1, 1]} : vector<8x64xf32> to vector<8x16xf32>
    %cst_29 = arith.constant dense<0.000000e+00> : vector<8x8xf32>
    %32 = tpu.matmul %29, %30, %cst_29 {dimension_numbers = #tpu.dot_dimension_numbers<[1], [1], [0], [0], [0, 0, 1, 0], [], []>} : vector<8x16xf32>, vector<8x16xf32>, vector<8x8xf32> -> vector<8x8xf32>
    %cst_30 = arith.constant dense<0xFF800000> : vector<8xf32>
    %33 = vector.multi_reduction <maximumf>, %32, %cst_30 [1] : vector<8x8xf32> to vector<8xf32>
    %34 = vector.shape_cast %33 : vector<8xf32> to vector<8x1xf32>
    %35 = vector.broadcast %34 : vector<8x1xf32> to vector<8x8xf32>
    %36 = arith.subf %32, %35 : vector<8x8xf32>
    %37 = math.exp %36 : vector<8x8xf32>
    %cst_31 = arith.constant dense<0.000000e+00> : vector<8xf32>
    %38 = vector.multi_reduction <add>, %37, %cst_31 [1] : vector<8x8xf32> to vector<8xf32>
    %39 = vector.shape_cast %38 : vector<8xf32> to vector<8x1xf32>
    %40 = vector.broadcast %39 : vector<8x1xf32> to vector<8x8xf32>
    %41 = arith.divf %37, %40 : vector<8x8xf32>
    %cst_32 = arith.constant dense<0.000000e+00> : vector<8x16xf32>
    %42 = tpu.matmul %41, %31, %cst_32 {dimension_numbers = #tpu.dot_dimension_numbers<[1], [0], [0], [1], [0, 0, 1, 1], [], []>} : vector<8x8xf32>, vector<8x16xf32>, vector<8x16xf32> -> vector<8x16xf32>
    %43 = vector.extract_strided_slice %27 {offsets = [0, 0], sizes = [16, 32], strides = [1, 1]} : vector<64x32xf32> to vector<16x32xf32>
    %cst_33 = arith.constant dense<0.000000e+00> : vector<8x32xf32>
    %44 = tpu.matmul %42, %43, %cst_33 {dimension_numbers = #tpu.dot_dimension_numbers<[1], [0], [0], [1], [0, 0, 1, 1], [], []>} : vector<8x16xf32>, vector<16x32xf32>, vector<8x32xf32> -> vector<8x32xf32>
    %45 = arith.addf %28, %44 : vector<8x32xf32>
    %46 = vector.extract_strided_slice %12 {offsets = [0, 16], sizes = [8, 16], strides = [1, 1]} : vector<8x64xf32> to vector<8x16xf32>
    %47 = vector.extract_strided_slice %19 {offsets = [0, 16], sizes = [8, 16], strides = [1, 1]} : vector<8x64xf32> to vector<8x16xf32>
    %48 = vector.extract_strided_slice %26 {offsets = [0, 16], sizes = [8, 16], strides = [1, 1]} : vector<8x64xf32> to vector<8x16xf32>
    %cst_34 = arith.constant dense<0.000000e+00> : vector<8x8xf32>
    %49 = tpu.matmul %46, %47, %cst_34 {dimension_numbers = #tpu.dot_dimension_numbers<[1], [1], [0], [0], [0, 0, 1, 0], [], []>} : vector<8x16xf32>, vector<8x16xf32>, vector<8x8xf32> -> vector<8x8xf32>
    %cst_35 = arith.constant dense<0xFF800000> : vector<8xf32>
    %50 = vector.multi_reduction <maximumf>, %49, %cst_35 [1] : vector<8x8xf32> to vector<8xf32>
    %51 = vector.shape_cast %50 : vector<8xf32> to vector<8x1xf32>
    %52 = vector.broadcast %51 : vector<8x1xf32> to vector<8x8xf32>
    %53 = arith.subf %49, %52 : vector<8x8xf32>
    %54 = math.exp %53 : vector<8x8xf32>
    %cst_36 = arith.constant dense<0.000000e+00> : vector<8xf32>
    %55 = vector.multi_reduction <add>, %54, %cst_36 [1] : vector<8x8xf32> to vector<8xf32>
    %56 = vector.shape_cast %55 : vector<8xf32> to vector<8x1xf32>
    %57 = vector.broadcast %56 : vector<8x1xf32> to vector<8x8xf32>
    %58 = arith.divf %54, %57 : vector<8x8xf32>
    %cst_37 = arith.constant dense<0.000000e+00> : vector<8x16xf32>
    %59 = tpu.matmul %58, %48, %cst_37 {dimension_numbers = #tpu.dot_dimension_numbers<[1], [0], [0], [1], [0, 0, 1, 1], [], []>} : vector<8x8xf32>, vector<8x16xf32>, vector<8x16xf32> -> vector<8x16xf32>
    %60 = vector.extract_strided_slice %27 {offsets = [16, 0], sizes = [16, 32], strides = [1, 1]} : vector<64x32xf32> to vector<16x32xf32>
    %cst_38 = arith.constant dense<0.000000e+00> : vector<8x32xf32>
    %61 = tpu.matmul %59, %60, %cst_38 {dimension_numbers = #tpu.dot_dimension_numbers<[1], [0], [0], [1], [0, 0, 1, 1], [], []>} : vector<8x16xf32>, vector<16x32xf32>, vector<8x32xf32> -> vector<8x32xf32>
    %62 = arith.addf %45, %61 : vector<8x32xf32>
    %63 = vector.extract_strided_slice %12 {offsets = [0, 32], sizes = [8, 16], strides = [1, 1]} : vector<8x64xf32> to vector<8x16xf32>
    %64 = vector.extract_strided_slice %19 {offsets = [0, 32], sizes = [8, 16], strides = [1, 1]} : vector<8x64xf32> to vector<8x16xf32>
    %65 = vector.extract_strided_slice %26 {offsets = [0, 32], sizes = [8, 16], strides = [1, 1]} : vector<8x64xf32> to vector<8x16xf32>
    %cst_39 = arith.constant dense<0.000000e+00> : vector<8x8xf32>
    %66 = tpu.matmul %63, %64, %cst_39 {dimension_numbers = #tpu.dot_dimension_numbers<[1], [1], [0], [0], [0, 0, 1, 0], [], []>} : vector<8x16xf32>, vector<8x16xf32>, vector<8x8xf32> -> vector<8x8xf32>
    %cst_40 = arith.constant dense<0xFF800000> : vector<8xf32>
    %67 = vector.multi_reduction <maximumf>, %66, %cst_40 [1] : vector<8x8xf32> to vector<8xf32>
    %68 = vector.shape_cast %67 : vector<8xf32> to vector<8x1xf32>
    %69 = vector.broadcast %68 : vector<8x1xf32> to vector<8x8xf32>
    %70 = arith.subf %66, %69 : vector<8x8xf32>
    %71 = math.exp %70 : vector<8x8xf32>
    %cst_41 = arith.constant dense<0.000000e+00> : vector<8xf32>
    %72 = vector.multi_reduction <add>, %71, %cst_41 [1] : vector<8x8xf32> to vector<8xf32>
    %73 = vector.shape_cast %72 : vector<8xf32> to vector<8x1xf32>
    %74 = vector.broadcast %73 : vector<8x1xf32> to vector<8x8xf32>
    %75 = arith.divf %71, %74 : vector<8x8xf32>
    %cst_42 = arith.constant dense<0.000000e+00> : vector<8x16xf32>
    %76 = tpu.matmul %75, %65, %cst_42 {dimension_numbers = #tpu.dot_dimension_numbers<[1], [0], [0], [1], [0, 0, 1, 1], [], []>} : vector<8x8xf32>, vector<8x16xf32>, vector<8x16xf32> -> vector<8x16xf32>
    %77 = vector.extract_strided_slice %27 {offsets = [32, 0], sizes = [16, 32], strides = [1, 1]} : vector<64x32xf32> to vector<16x32xf32>
    %cst_43 = arith.constant dense<0.000000e+00> : vector<8x32xf32>
    %78 = tpu.matmul %76, %77, %cst_43 {dimension_numbers = #tpu.dot_dimension_numbers<[1], [0], [0], [1], [0, 0, 1, 1], [], []>} : vector<8x16xf32>, vector<16x32xf32>, vector<8x32xf32> -> vector<8x32xf32>
    %79 = arith.addf %62, %78 : vector<8x32xf32>
    %80 = vector.extract_strided_slice %12 {offsets = [0, 48], sizes = [8, 16], strides = [1, 1]} : vector<8x64xf32> to vector<8x16xf32>
    %81 = vector.extract_strided_slice %19 {offsets = [0, 48], sizes = [8, 16], strides = [1, 1]} : vector<8x64xf32> to vector<8x16xf32>
    %82 = vector.extract_strided_slice %26 {offsets = [0, 48], sizes = [8, 16], strides = [1, 1]} : vector<8x64xf32> to vector<8x16xf32>
    %cst_44 = arith.constant dense<0.000000e+00> : vector<8x8xf32>
    %83 = tpu.matmul %80, %81, %cst_44 {dimension_numbers = #tpu.dot_dimension_numbers<[1], [1], [0], [0], [0, 0, 1, 0], [], []>} : vector<8x16xf32>, vector<8x16xf32>, vector<8x8xf32> -> vector<8x8xf32>
    %cst_45 = arith.constant dense<0xFF800000> : vector<8xf32>
    %84 = vector.multi_reduction <maximumf>, %83, %cst_45 [1] : vector<8x8xf32> to vector<8xf32>
    %85 = vector.shape_cast %84 : vector<8xf32> to vector<8x1xf32>
    %86 = vector.broadcast %85 : vector<8x1xf32> to vector<8x8xf32>
    %87 = arith.subf %83, %86 : vector<8x8xf32>
    %88 = math.exp %87 : vector<8x8xf32>
    %cst_46 = arith.constant dense<0.000000e+00> : vector<8xf32>
    %89 = vector.multi_reduction <add>, %88, %cst_46 [1] : vector<8x8xf32> to vector<8xf32>
    %90 = vector.shape_cast %89 : vector<8xf32> to vector<8x1xf32>
    %91 = vector.broadcast %90 : vector<8x1xf32> to vector<8x8xf32>
    %92 = arith.divf %88, %91 : vector<8x8xf32>
    %cst_47 = arith.constant dense<0.000000e+00> : vector<8x16xf32>
    %93 = tpu.matmul %92, %82, %cst_47 {dimension_numbers = #tpu.dot_dimension_numbers<[1], [0], [0], [1], [0, 0, 1, 1], [], []>} : vector<8x8xf32>, vector<8x16xf32>, vector<8x16xf32> -> vector<8x16xf32>
    %94 = vector.extract_strided_slice %27 {offsets = [48, 0], sizes = [16, 32], strides = [1, 1]} : vector<64x32xf32> to vector<16x32xf32>
    %cst_48 = arith.constant dense<0.000000e+00> : vector<8x32xf32>
    %95 = tpu.matmul %93, %94, %cst_48 {dimension_numbers = #tpu.dot_dimension_numbers<[1], [0], [0], [1], [0, 0, 1, 1], [], []>} : vector<8x16xf32>, vector<16x32xf32>, vector<8x32xf32> -> vector<8x32xf32>
    %96 = arith.addf %79, %95 : vector<8x32xf32>
    %c0_49 = arith.constant 0 : index
    %c0_50 = arith.constant 0 : index
    %97 = vector.load %arg7[%c0_49, %c0_50] : memref<1x32xf32, #tpu.memory_space<vmem>>, vector<1x32xf32>
    %98 = vector.broadcast %97 : vector<1x32xf32> to vector<8x32xf32>
    %99 = arith.addf %96, %98 : vector<8x32xf32>
    %c0_51 = arith.constant 0 : index
    %c0_52 = arith.constant 0 : index
    %c0_53 = arith.constant 0 : index
    %100 = vector.load %arg8[%c0_51, %c0_52, %c0_53] : memref<1x8x32xf32, #tpu.memory_space<vmem>>, vector<1x8x32xf32>
    %101 = vector.shape_cast %100 : vector<1x8x32xf32> to vector<8x32xf32>
    %102 = vector.shape_cast %99 : vector<8x32xf32> to vector<1x8x32xf32>
    tpu.vector_store %arg8[%c0_51, %c0_52, %c0_53], %102 {strides = array<i32>} : memref<1x8x32xf32, #tpu.memory_space<vmem>>, vector<1x8x32xf32>,
    return
  }
  func.func @transform_0(%arg0: i32) -> (i32, i32, i32) {
    %c0_i32 = arith.constant 0 : i32
    %c0_i32_0 = arith.constant 0 : i32
    %c0_i32_1 = arith.constant 0 : i32
    return %arg0, %c0_i32, %c0_i32_0 : i32, i32, i32
  }
  func.func @transform_1(%arg0: i32) -> (i32, i32, i32) {
    %c0_i32 = arith.constant 0 : i32
    %c0_i32_0 = arith.constant 0 : i32
    %c0_i32_1 = arith.constant 0 : i32
    return %arg0, %c0_i32, %c0_i32_0 : i32, i32, i32
  }
  func.func @transform_2(%arg0: i32) -> (i32, i32, i32) {
    %c0_i32 = arith.constant 0 : i32
    %c0_i32_0 = arith.constant 0 : i32
    %c0_i32_1 = arith.constant 0 : i32
    return %arg0, %c0_i32, %c0_i32_0 : i32, i32, i32
  }
  func.func @transform_3(%arg0: i32) -> (i32, i32, i32) {
    %c0_i32 = arith.constant 0 : i32
    %c0_i32_0 = arith.constant 0 : i32
    %c0_i32_1 = arith.constant 0 : i32
    %c0_i32_2 = arith.constant 0 : i32
    return %c0_i32, %c0_i32_0, %c0_i32_1 : i32, i32, i32
  }
  func.func @transform_4(%arg0: i32) -> (i32, i32, i32) {
    %c0_i32 = arith.constant 0 : i32
    %c0_i32_0 = arith.constant 0 : i32
    %c0_i32_1 = arith.constant 0 : i32
    %c0_i32_2 = arith.constant 0 : i32
    return %c0_i32, %c0_i32_0, %c0_i32_1 : i32, i32, i32
  }
  func.func @transform_5(%arg0: i32) -> (i32, i32) {
    %c0_i32 = arith.constant 0 : i32
    %c0_i32_0 = arith.constant 0 : i32
    %c0_i32_1 = arith.constant 0 : i32
    return %c0_i32, %c0_i32_0 : i32, i32
  }
  func.func @transform_6(%arg0: i32) -> (i32, i32) {
    %c0_i32 = arith.constant 0 : i32
    %c0_i32_0 = arith.constant 0 : i32
    %c0_i32_1 = arith.constant 0 : i32
    return %c0_i32, %c0_i32_0 : i32, i32
  }
  func.func @transform_7(%arg0: i32) -> (i32, i32, i32) {
    %c0_i32 = arith.constant 0 : i32
    %c0_i32_0 = arith.constant 0 : i32
    %c0_i32_1 = arith.constant 0 : i32
    return %arg0, %c0_i32, %c0_i32_0 : i32, i32, i32
  }
}

</mosaic_0001>

<llo_original>
// kernel: tpu_custom_call.1
$region0: #{tpu_custom_call.1}
  #allocation0 [shape = 'u32[]', space=smem, size = 0x4, offset = 0x4, fixed_abs, tag = 'smem constant byte address 0x4 - core index']
  #allocation1 [shape = 'u32[144,128]{1,0:T(1,128)}', space=vmem, size = 0x12000, scoped, tag = 'internal scratch']
  %s0 = inlined_call_operand.hbm [shape: f32[2,8,32], index: 0, kind: input, shape index: {}]
  %s1 = inlined_call_operand.hbm [shape: f32[2,8,32], index: 1, kind: input, shape index: {}]
  %s2 = inlined_call_operand.hbm [shape: f32[2,8,32], index: 2, kind: input, shape index: {}]
  %s3 = inlined_call_operand.vmem [shape: f32[3,32,64], index: 3, kind: input, shape index: {}]
  %s4 = inlined_call_operand.vmem [shape: f32[3,1,64], index: 4, kind: input, shape index: {}]
  %s5 = inlined_call_operand.vmem [shape: f32[64,32], index: 5, kind: input, shape index: {}]
  %s6 = inlined_call_operand.vmem [shape: f32[1,32], index: 6, kind: input, shape index: {}]
  %s7 = inlined_call_operand.hbm [shape: f32[2,8,32], index: 7, kind: output, shape index: {}]
  %s8 = sld [smem:[#allocation0]]
  $region73: #{tpu_custom_call.1} parent=0
    _
  %s10 = ssub.s32 1, %s8
  %s11 = scalar_select 0, %s10, %s8
  $region1: #{tpu_custom_call.1} parent=0
    #allocation2 [shape = 'u8[8192]{0}', space=vmem, size = 0x2000, scoped, tag = 'input window, operand 0']
    #allocation3 [shape = 's32[2]{0}', space=sflag, size = 0x8, scoped, tag = 'scoped memory for tpu_custom_call.1']
    #allocation4 [shape = 's32[2]{0}', space=sflag, size = 0x8, scoped, tag = 'scoped memory for tpu_custom_call.1']
    #allocation5 [shape = 'u8[8192]{0}', space=vmem, size = 0x2000, scoped, tag = 'input window, operand 1']
    #allocation6 [shape = 's32[2]{0}', space=sflag, size = 0x8, scoped, tag = 'scoped memory for tpu_custom_call.1']
    #allocation7 [shape = 'u8[8192]{0}', space=vmem, size = 0x2000, scoped, tag = 'input window, operand 2']
    #allocation8 [shape = 'u8[8192]{0}', space=vmem, size = 0x2000, scoped, tag = 'output window, operand 0']
    %12 = vsyncpa [#allocation3], 0
    %s13 = scalar_lea.sflag [#allocation3], 1
    %14 = vsyncpa %s13, 0
    %15 = vsyncpa [#allocation6], 0
    %s16 = scalar_lea.sflag [#allocation6], 1
    %17 = vsyncpa %s16, 0
    %18 = vsyncpa [#allocation4], 0
    %s19 = scalar_lea.sflag [#allocation4], 1
    %20 = vsyncpa %s19, 0
    loop: start=0, step=1, limit=4
    $region2: #{tpu_custom_call.1} parent=1 // loop_pre_header
      _
    $region3: #{tpu_custom_call.1} parent=1 // loop_header
      %s22 = sphi 0, %s26
      %p23 = scmp.ge.s32.totalorder %s22, 4
      %s32 = sphi 0, %s34
      %s35 = sphi 0, %s32
      %s36 = sphi 0, %s35
      %s52 = sphi 0, %s36
      %s58 = sphi 0, %s60
      %s61 = sphi 0, %s58
      %s62 = sphi 0, %s61
      %s78 = sphi 0, %s62
      %s84 = sphi 0, %s86
      %s87 = sphi 0, %s84
      %s88 = sphi 0, %s87
      %s104 = sphi 0, %s88
      %s108 = sphi 0, %s108
      %s110 = sphi 0, %s108
      %s111 = sphi 0, %s110
      %s125 = sphi 0, %s111
      %s129 = sphi 0, %s129
      %s131 = sphi 0, %s129
      %s132 = sphi 0, %s131
      %s146 = sphi 0, %s132
      %s150 = sphi 0, %s150
      %s152 = sphi 0, %s150
      %s153 = sphi 0, %s152
      %s167 = sphi 0, %s153
      %s171 = sphi 0, %s171
      %s173 = sphi 0, %s171
      %s174 = sphi 0, %s173
      %s188 = sphi 0, %s174
      %s194 = sphi 0, %s196
      %s197 = sphi 0, %s194
      %s198 = sphi 0, %s197
      %s214 = sphi 0, %s198
    $region4: #{tpu_custom_call.1} parent=1 // loop_header_branch
      %25 = sbr.rel (%p23) target = $region8
    $region5: #{tpu_custom_call.1} parent=1 // loop_body
      %s27 = ssub.s32 %s22, 1
      %s28 = ssub.s32 %s22, 2
      %s29 = sadd.s32 %s22, 1
      %s30 = ssub.s32 %s22, %s29
      %p31 = scmp.eq.s32.totalorder %s30, 0
      %s33 = sadd.s32 %s32, 1
      %s34 = scalar_select %p31, %s32, %s33
      %p37 = pneg %p31
      %p38 = scmp.eq.s32.totalorder %s22, 1
      %p39 = por %p37, %p38
      %p40 = scmp.ne.s32.totalorder %s32, %s35
      %p41 = scmp.eq.s32.totalorder %s22, 0
      %p42 = por %p40, %p41
      %p43 = scmp.ne.s32.totalorder %s32, %s35
      %p44 = scmp.eq.s32.totalorder %s27, 1
      %p45 = por %p43, %p44
      %p46 = scmp.ne.s32.totalorder %s35, %s36
      %p47 = scmp.eq.s32.totalorder %s27, 0
      %p48 = por %p46, %p47
      %p49 = scmp.ne.s32.totalorder %s35, %s36
      %p50 = scmp.eq.s32.totalorder %s28, 1
      %p51 = por %p49, %p50
      %p53 = scmp.ne.s32.totalorder %s36, %s52
      %p54 = scmp.eq.s32.totalorder %s28, 0
      %p55 = por %p53, %p54
      %s56 = ssub.s32 %s22, %s29
      %p57 = scmp.eq.s32.totalorder %s56, 0
      %s59 = sadd.s32 %s58, 1
      %s60 = scalar_select %p57, %s58, %s59
      %p63 = pneg %p57
      %p64 = scmp.eq.s32.totalorder %s22, 1
      %p65 = por %p63, %p64
      %p66 = scmp.ne.s32.totalorder %s58, %s61
      %p67 = scmp.eq.s32.totalorder %s22, 0
      %p68 = por %p66, %p67
      %p69 = scmp.ne.s32.totalorder %s58, %s61
      %p70 = scmp.eq.s32.totalorder %s27, 1
      %p71 = por %p69, %p70
      %p72 = scmp.ne.s32.totalorder %s61, %s62
      %p73 = scmp.eq.s32.totalorder %s27, 0
      %p74 = por %p72, %p73
      %p75 = scmp.ne.s32.totalorder %s61, %s62
      %p76 = scmp.eq.s32.totalorder %s28, 1
      %p77 = por %p75, %p76
      %p79 = scmp.ne.s32.totalorder %s62, %s78
      %p80 = scmp.eq.s32.totalorder %s28, 0
      %p81 = por %p79, %p80
      %s82 = ssub.s32 %s22, %s29
      %p83 = scmp.eq.s32.totalorder %s82, 0
      %s85 = sadd.s32 %s84, 1
      %s86 = scalar_select %p83, %s84, %s85
      %p89 = pneg %p83
      %p90 = scmp.eq.s32.totalorder %s22, 1
      %p91 = por %p89, %p90
      %p92 = scmp.ne.s32.totalorder %s84, %s87
      %p93 = scmp.eq.s32.totalorder %s22, 0
      %p94 = por %p92, %p93
      %p95 = scmp.ne.s32.totalorder %s84, %s87
      %p96 = scmp.eq.s32.totalorder %s27, 1
      %p97 = por %p95, %p96
      %p98 = scmp.ne.s32.totalorder %s87, %s88
      %p99 = scmp.eq.s32.totalorder %s27, 0
      %p100 = por %p98, %p99
      %p101 = scmp.ne.s32.totalorder %s87, %s88
      %p102 = scmp.eq.s32.totalorder %s28, 1
      %p103 = por %p101, %p102
      %p105 = scmp.ne.s32.totalorder %s88, %s104
      %p106 = scmp.eq.s32.totalorder %s28, 0
      %p107 = por %p105, %p106
      %s109 = sadd.s32 %s108, 1
      %p112 = scmp.eq.s32.totalorder %s22, 1
      %p113 = scmp.ne.s32.totalorder %s108, %s110
      %p114 = scmp.eq.s32.totalorder %s22, 0
      %p115 = por %p113, %p114
      %p116 = scmp.ne.s32.totalorder %s108, %s110
      %p117 = scmp.eq.s32.totalorder %s27, 1
      %p118 = por %p116, %p117
      %p119 = scmp.ne.s32.totalorder %s110, %s111
      %p120 = scmp.eq.s32.totalorder %s27, 0
      %p121 = por %p119, %p120
      %p122 = scmp.ne.s32.totalorder %s110, %s111
      %p123 = scmp.eq.s32.totalorder %s28, 1
      %p124 = por %p122, %p123
      %p126 = scmp.ne.s32.totalorder %s111, %s125
      %p127 = scmp.eq.s32.totalorder %s28, 0
      %p128 = por %p126, %p127
      %s130 = sadd.s32 %s129, 1
      %p133 = scmp.eq.s32.totalorder %s22, 1
      %p134 = scmp.ne.s32.totalorder %s129, %s131
      %p135 = scmp.eq.s32.totalorder %s22, 0
      %p136 = por %p134, %p135
      %p137 = scmp.ne.s32.totalorder %s129, %s131
      %p138 = scmp.eq.s32.totalorder %s27, 1
      %p139 = por %p137, %p138
      %p140 = scmp.ne.s32.totalorder %s131, %s132
      %p141 = scmp.eq.s32.totalorder %s27, 0
      %p142 = por %p140, %p141
      %p143 = scmp.ne.s32.totalorder %s131, %s132
      %p144 = scmp.eq.s32.totalorder %s28, 1
      %p145 = por %p143, %p144
      %p147 = scmp.ne.s32.totalorder %s132, %s146
      %p148 = scmp.eq.s32.totalorder %s28, 0
      %p149 = por %p147, %p148
      %s151 = sadd.s32 %s150, 1
      %p154 = scmp.eq.s32.totalorder %s22, 1
      %p155 = scmp.ne.s32.totalorder %s150, %s152
      %p156 = scmp.eq.s32.totalorder %s22, 0
      %p157 = por %p155, %p156
      %p158 = scmp.ne.s32.totalorder %s150, %s152
      %p159 = scmp.eq.s32.totalorder %s27, 1
      %p160 = por %p158, %p159
      %p161 = scmp.ne.s32.totalorder %s152, %s153
      %p162 = scmp.eq.s32.totalorder %s27, 0
      %p163 = por %p161, %p162
      %p164 = scmp.ne.s32.totalorder %s152, %s153
      %p165 = scmp.eq.s32.totalorder %s28, 1
      %p166 = por %p164, %p165
      %p168 = scmp.ne.s32.totalorder %s153, %s167
      %p169 = scmp.eq.s32.totalorder %s28, 0
      %p170 = por %p168, %p169
      %s172 = sadd.s32 %s171, 1
      %p175 = scmp.eq.s32.totalorder %s22, 1
      %p176 = scmp.ne.s32.totalorder %s171, %s173
      %p177 = scmp.eq.s32.totalorder %s22, 0
      %p178 = por %p176, %p177
      %p179 = scmp.ne.s32.totalorder %s171, %s173
      %p180 = scmp.eq.s32.totalorder %s27, 1
      %p181 = por %p179, %p180
      %p182 = scmp.ne.s32.totalorder %s173, %s174
      %p183 = scmp.eq.s32.totalorder %s27, 0
      %p184 = por %p182, %p183
      %p185 = scmp.ne.s32.totalorder %s173, %s174
      %p186 = scmp.eq.s32.totalorder %s28, 1
      %p187 = por %p185, %p186
      %p189 = scmp.ne.s32.totalorder %s174, %s188
      %p190 = scmp.eq.s32.totalorder %s28, 0
      %p191 = por %p189, %p190
      %s192 = ssub.s32 %s22, %s29
      %p193 = scmp.eq.s32.totalorder %s192, 0
      %s195 = sadd.s32 %s194, 1
      %s196 = scalar_select %p193, %s194, %s195
      %p199 = pneg %p193
      %p200 = scmp.eq.s32.totalorder %s22, 1
      %p201 = por %p199, %p200
      %p202 = scmp.ne.s32.totalorder %s194, %s197
      %p203 = scmp.eq.s32.totalorder %s22, 0
      %p204 = por %p202, %p203
      %p205 = scmp.ne.s32.totalorder %s194, %s197
      %p206 = scmp.eq.s32.totalorder %s27, 1
      %p207 = por %p205, %p206
      %p208 = scmp.ne.s32.totalorder %s197, %s198
      %p209 = scmp.eq.s32.totalorder %s27, 0
      %p210 = por %p208, %p209
      %p211 = scmp.ne.s32.totalorder %s197, %s198
      %p212 = scmp.eq.s32.totalorder %s28, 1
      %p213 = por %p211, %p212
      %p215 = scmp.ne.s32.totalorder %s198, %s214
      %p216 = scmp.eq.s32.totalorder %s28, 0
      %p217 = por %p215, %p216
      %p218 = scmp.le.s32.totalorder 1, %s22
      %p219 = scmp.lt.s32.totalorder %s22, 3
      %p220 = pnand %p218, %p219
      %p221 = pneg %p220
      // Predicated region
      $region9: #{tpu_custom_call.1} parent=5 // pred_check
        _
      $region10: #{tpu_custom_call.1} parent=5 // pred_check_branch
        %223 = sbr.rel (%p220) target = $region12
      $region11: #{tpu_custom_call.1} parent=5 // pred_region
        %s224 = ssub.s32 %s22, 1
        // Predicated region
        $region13: #{tpu_custom_call.1} parent=11 // pred_check
          %p225 = pneg %p121
        $region14: #{tpu_custom_call.1} parent=11 // pred_check_branch
          %227 = sbr.rel (%p225) target = $region16
        $region15: #{tpu_custom_call.1} parent=11 // pred_region
          _
        $region16: #{tpu_custom_call.1} parent=11 // pred_fallthru
          _
        // Predicated region
        $region17: #{tpu_custom_call.1} parent=11 // pred_check
          %p228 = pneg %p142
        $region18: #{tpu_custom_call.1} parent=11 // pred_check_branch
          %230 = sbr.rel (%p228) target = $region20
        $region19: #{tpu_custom_call.1} parent=11 // pred_region
          _
        $region20: #{tpu_custom_call.1} parent=11 // pred_fallthru
          _
        // Predicated region
        $region21: #{tpu_custom_call.1} parent=11 // pred_check
          %p231 = pneg %p163
        $region22: #{tpu_custom_call.1} parent=11 // pred_check_branch
          %233 = sbr.rel (%p231) target = $region24
        $region23: #{tpu_custom_call.1} parent=11 // pred_region
          _
        $region24: #{tpu_custom_call.1} parent=11 // pred_fallthru
          _
        // Predicated region
        $region25: #{tpu_custom_call.1} parent=11 // pred_check
          %p234 = pneg %p184
        $region26: #{tpu_custom_call.1} parent=11 // pred_check_branch
          %236 = sbr.rel (%p234) target = $region28
        $region27: #{tpu_custom_call.1} parent=11 // pred_region
          _
        $region28: #{tpu_custom_call.1} parent=11 // pred_fallthru
          _
      $region12: #{tpu_custom_call.1} parent=5 // pred_fallthru
        _
      %p237 = scmp.lt.s32.totalorder %s22, 2
      // Predicated region
      $region29: #{tpu_custom_call.1} parent=5 // pred_check
        %p238 = pneg %p237
      $region30: #{tpu_custom_call.1} parent=5 // pred_check_branch
        %240 = sbr.rel (%p238) target = $region32
      $region31: #{tpu_custom_call.1} parent=5 // pred_region
        // Predicated region
        $region33: #{tpu_custom_call.1} parent=31 // pred_check
          %p241 = pneg %p42
        $region34: #{tpu_custom_call.1} parent=31 // pred_check_branch
          %243 = sbr.rel (%p241) target = $region36
        $region35: #{tpu_custom_call.1} parent=31 // pred_region
          %s244 = sand.u32 %s32, 1
          %s245 = scalar_lea.sflag [#allocation3], %s244
          %s246 = sand.u32 %s32, 1
          %s247 = smul.addr %s246, 8
          %s248 = scalar_lea.vmem [#allocation2], %s247
          %s250 = ssub.s32 128, 128
          %251 = vsyncadd %s245, %s250
          %s252 = smul.addr %s22, 128
          %s253 = scalar_lea.hbm %s0, %s252
          %s255 = sshll.u32 %s248, 4
          %s256 = int_to_ptr.vmem [resolvable:$true] %s255
          %258 = dma.hbm_to_vmem [thread:$0]  %s253, 128, %s256, %s245
        $region36: #{tpu_custom_call.1} parent=31 // pred_fallthru
          _
        // Predicated region
        $region37: #{tpu_custom_call.1} parent=31 // pred_check
          %p259 = pneg %p68
        $region38: #{tpu_custom_call.1} parent=31 // pred_check_branch
          %261 = sbr.rel (%p259) target = $region40
        $region39: #{tpu_custom_call.1} parent=31 // pred_region
          %s262 = sand.u32 %s22, 1
          %s263 = scalar_lea.sflag [#allocation6], %s262
          %s264 = sand.u32 %s58, 1
          %s265 = smul.addr %s264, 8
          %s266 = scalar_lea.vmem [#allocation5], %s265
          %s268 = ssub.s32 128, 128
          %269 = vsyncadd %s263, %s268
          %s270 = smul.addr %s22, 128
          %s271 = scalar_lea.hbm %s1, %s270
          %s273 = sshll.u32 %s266, 4
          %s274 = int_to_ptr.vmem [resolvable:$true] %s273
          %276 = dma.hbm_to_vmem [thread:$0]  %s271, 128, %s274, %s263
        $region40: #{tpu_custom_call.1} parent=31 // pred_fallthru
          _
        // Predicated region
        $region41: #{tpu_custom_call.1} parent=31 // pred_check
          %p277 = pneg %p94
        $region42: #{tpu_custom_call.1} parent=31 // pred_check_branch
          %279 = sbr.rel (%p277) target = $region44
        $region43: #{tpu_custom_call.1} parent=31 // pred_region
          %s280 = sand.u32 %s22, 1
          %s281 = scalar_lea.sflag [#allocation6], %s280
          %s282 = sand.u32 %s84, 1
          %s283 = smul.addr %s282, 8
          %s284 = scalar_lea.vmem [#allocation7], %s283
          %s286 = ssub.s32 128, 128
          %287 = vsyncadd %s281, %s286
          %s288 = smul.addr %s22, 128
          %s289 = scalar_lea.hbm %s2, %s288
          %s291 = sshll.u32 %s284, 4
          %s292 = int_to_ptr.vmem [resolvable:$true] %s291
          %294 = dma.hbm_to_vmem [thread:$0]  %s289, 128, %s292, %s281
        $region44: #{tpu_custom_call.1} parent=31 // pred_fallthru
          _
      $region32: #{tpu_custom_call.1} parent=5 // pred_fallthru
        _
      %p295 = scmp.le.s32.totalorder 1, %s22
      %p296 = scmp.lt.s32.totalorder %s22, 3
      %p297 = pnand %p295, %p296
      %p298 = pneg %p297
      // Predicated region
      $region45: #{tpu_custom_call.1} parent=5 // pred_check
        _
      $region46: #{tpu_custom_call.1} parent=5 // pred_check_branch
        %300 = sbr.rel (%p297) target = $region48
      $region47: #{tpu_custom_call.1} parent=5 // pred_region
        %s301 = ssub.s32 %s22, 1
        %s302 = sand.u32 %s35, 1
        %s303 = scalar_lea.sflag [#allocation3], %s302
        %s304 = sand.u32 %s35, 1
        %s305 = smul.addr %s304, 8
        %s306 = scalar_lea.vmem [#allocation2], %s305
        // Predicated region
        $region49: #{tpu_custom_call.1} parent=47 // pred_check
          %p307 = pneg %p48
        $region50: #{tpu_custom_call.1} parent=47 // pred_check_branch
          %309 = sbr.rel (%p307) target = $region52
        $region51: #{tpu_custom_call.1} parent=47 // pred_region
          %310 = dma.done %s303, 128
        $region52: #{tpu_custom_call.1} parent=47 // pred_fallthru
          _
        %s311 = sand.u32 %s27, 1
        %s312 = scalar_lea.sflag [#allocation6], %s311
        %s313 = sand.u32 %s61, 1
        %s314 = smul.addr %s313, 8
        %s315 = scalar_lea.vmem [#allocation5], %s314
        // Predicated region
        $region53: #{tpu_custom_call.1} parent=47 // pred_check
          %p316 = pneg %p74
        $region54: #{tpu_custom_call.1} parent=47 // pred_check_branch
          %318 = sbr.rel (%p316) target = $region56
        $region55: #{tpu_custom_call.1} parent=47 // pred_region
          %319 = dma.done %s312, 128
        $region56: #{tpu_custom_call.1} parent=47 // pred_fallthru
          _
        %s320 = sand.u32 %s27, 1
        %s321 = scalar_lea.sflag [#allocation6], %s320
        %s322 = sand.u32 %s87, 1
        %s323 = smul.addr %s322, 8
        %s324 = scalar_lea.vmem [#allocation7], %s323
        // Predicated region
        $region57: #{tpu_custom_call.1} parent=47 // pred_check
          %p325 = pneg %p100
        $region58: #{tpu_custom_call.1} parent=47 // pred_check_branch
          %327 = sbr.rel (%p325) target = $region60
        $region59: #{tpu_custom_call.1} parent=47 // pred_region
          %328 = dma.done %s321, 128
        $region60: #{tpu_custom_call.1} parent=47 // pred_fallthru
          _
        %s329 = sand.u32 %s35, 1
        %s330 = scalar_lea.sflag [#allocation3], %s329
        %s331 = sand.u32 %s35, 1
        %s332 = smul.addr %s331, 8
        %s333 = scalar_lea.vmem [#allocation2], %s332
        %p334 = pneg %p48
        %p335 = pneg %p45
        %s336 = sand.u32 %s27, 1
        %s337 = scalar_lea.sflag [#allocation6], %s336
        %s338 = sand.u32 %s61, 1
        %s339 = smul.addr %s338, 8
        %s340 = scalar_lea.vmem [#allocation5], %s339
        %p341 = pneg %p74
        %p342 = pneg %p71
        %s343 = sand.u32 %s27, 1
        %s344 = scalar_lea.sflag [#allocation6], %s343
        %s345 = sand.u32 %s87, 1
        %s346 = smul.addr %s345, 8
        %s347 = scalar_lea.vmem [#allocation7], %s346
        %p348 = pneg %p100
        %p349 = pneg %p97
        %p350 = pneg %p121
        %p351 = pneg %p118
        %p352 = pneg %p142
        %p353 = pneg %p139
        %p354 = pneg %p163
        %p355 = pneg %p160
        %p356 = pneg %p184
        %p357 = pneg %p181
        %p358 = pneg %p210
        %p359 = pneg %p207
        %s360 = sand.u32 %s197, 1
        %s361 = scalar_lea.sflag [#allocation4], %s360
        %s362 = sand.u32 %s197, 1
        %s363 = smul.addr %s362, 8
        %s364 = scalar_lea.vmem [#allocation8], %s363
        %v365 = vld [vmem:[%s306] sm:$0xff]
        %v366 = vld [vmem:[%s315] sm:$0xff]
        %v367 = vld [vmem:[%s324] sm:$0xff]
        %v368 = vld [vmem:[%s3] sm:$0xff]
        %v369 = vld [vmem:[%s3 + $0x8] sm:$0xff]
        %v370 = vld [vmem:[%s3 + $0x10] sm:$0xff]
        %v371 = vld [vmem:[%s3 + $0x18] sm:$0xff]
        %v372 = vld [vmem:[%s4] sm:$0x1]
        %v374 = vlaneseq
        %v375 = vshrl.u32 %v374, 7
        %v376 = vsub.s32 0, %v375
        %v377 = vrot.slane %v372, %v376
        %vm379 = vcmask 261120
        %v381 = vsel %vm379, %v365, 0
        %383 = vmatprep.subr.mxu0 0.0
        %384 = vmatpush1.msra.mxu0 %v368
        %385 = vmatprep.subr.mxu0 0.0
        %386 = vmatpush1.msra.mxu0 %v369
        %387 = vmatprep.subr.mxu0 0.0
        %388 = vmatpush1.msra.mxu0 %v370
        %389 = vmatprep.subr.mxu0 0.0
        %390 = vmatpush1.msra.mxu0 %v371
        %391 = vmatprep.subr.mxu0 0.0
        %392 = vmatpush1.msra.mxu0 0.0
        %393 = vmatprep.subr.mxu0 0.0
        %394 = vmatpush1.msra.mxu0 0.0
        %395 = vmatprep.subr.mxu0 0.0
        %396 = vmatpush1.msra.mxu0 0.0
        %397 = vmatprep.subr.mxu0 0.0
        %398 = vmatpush1.msra.mxu0 0.0
        %399 = vmatprep.subr.mxu0 0.0
        %400 = vmatpush1.msra.mxu0 0.0
        %401 = vmatprep.subr.mxu0 0.0
        %402 = vmatpush1.msra.mxu0 0.0
        %403 = vmatprep.subr.mxu0 0.0
        %404 = vmatpush1.msra.mxu0 0.0
        %405 = vmatprep.subr.mxu0 0.0
        %406 = vmatpush1.msra.mxu0 0.0
        %407 = vmatprep.subr.mxu0 0.0
        %408 = vmatpush1.msra.mxu0 0.0
        %409 = vmatprep.subr.mxu0 0.0
        %410 = vmatpush1.msra.mxu0 0.0
        %411 = vmatprep.subr.mxu0 0.0
        %412 = vmatpush1.msra.mxu0 0.0
        %413 = vmatprep.subr.mxu0 0.0
        %414 = vmatpush1.msra.mxu0 0.0
        %415 = vmatprep.subr.mxu0 0.0
        %416 = vmatpush1.msra.mxu0 0.0
        %417 = vmatprep.subr.mxu0 0.0
        %418 = vmatpush1.msra.mxu0 0.0
        %419 = vmatprep.subr.mxu0 0.0
        %420 = vmatpush1.msra.mxu0 0.0
        %421 = vmatprep.subr.mxu0 0.0
        %422 = vmatpush1.msra.mxu0 0.0
        %423 = vmatprep.subr.mxu0 0.0
        %424 = vmatpush1.msra.mxu0 0.0
        %425 = vmatprep.subr.mxu0 0.0
        %426 = vmatpush1.msra.mxu0 0.0
        %427 = vmatprep.subr.mxu0 0.0
        %428 = vmatpush1.msra.mxu0 0.0
        %429 = vmatprep.subr.mxu0 0.0
        %430 = vmatpush1.msra.mxu0 0.0
        %431 = vmatprep.subr.mxu0 0.0
        %432 = vmatpush1.msra.mxu0 0.0
        %433 = vmatprep.subr.mxu0 0.0
        %434 = vmatpush1.msra.mxu0 0.0
        %435 = vmatprep.subr.mxu0 0.0
        %436 = vmatpush1.msra.mxu0 0.0
        %437 = vmatprep.subr.mxu0 0.0
        %438 = vmatpush1.msra.mxu0 0.0
        %439 = vmatprep.subr.mxu0 0.0
        %440 = vmatpush1.msra.mxu0 0.0
        %441 = vmatprep.subr.mxu0 0.0
        %442 = vmatpush1.msra.mxu0 0.0
        %443 = vmatprep.subr.mxu0 0.0
        %444 = vmatpush1.msra.mxu0 0.0
        %445 = vmatprep.subr.mxu0 0.0
        %446 = vmatpush1.msra.mxu0 0.0
        %447 = vmatprep.mubr.f32.mxu0 0.0
        %448 = vmatmul.mubr.f32.gmra.mrb[0].mxu0 %v381
        %v449 = vpop.f32.mrb[0].mxu0
        %v450 = vadd.f32 %v377, %v449
        %v451 = vpop.f32.mrb[0].mxu0
        %452 = vdwg.mxu0
        %s453 = scalar_lea.vmem %s3, 32
        %v454 = vld [vmem:[%s453] sm:$0xff]
        %v455 = vld [vmem:[%s453 + $0x8] sm:$0xff]
        %v456 = vld [vmem:[%s453 + $0x10] sm:$0xff]
        %v457 = vld [vmem:[%s453 + $0x18] sm:$0xff]
        %s458 = scalar_lea.vmem %s4, 1
        %v459 = vld [vmem:[%s458] sm:$0x1]
        %v461 = vlaneseq
        %v462 = vshrl.u32 %v461, 7
        %v463 = vsub.s32 0, %v462
        %v464 = vrot.slane %v459, %v463
        %v467 = vsel %vm379, %v366, 0
        %469 = vmatprep.subr.mxu0 0.0
        %470 = vmatpush1.msra.mxu0 %v454
        %471 = vmatprep.subr.mxu0 0.0
        %472 = vmatpush1.msra.mxu0 %v455
        %473 = vmatprep.subr.mxu0 0.0
        %474 = vmatpush1.msra.mxu0 %v456
        %475 = vmatprep.subr.mxu0 0.0
        %476 = vmatpush1.msra.mxu0 %v457
        %477 = vmatprep.subr.mxu0 0.0
        %478 = vmatpush1.msra.mxu0 0.0
        %479 = vmatprep.subr.mxu0 0.0
        %480 = vmatpush1.msra.mxu0 0.0
        %481 = vmatprep.subr.mxu0 0.0
        %482 = vmatpush1.msra.mxu0 0.0
        %483 = vmatprep.subr.mxu0 0.0
        %484 = vmatpush1.msra.mxu0 0.0
        %485 = vmatprep.subr.mxu0 0.0
        %486 = vmatpush1.msra.mxu0 0.0
        %487 = vmatprep.subr.mxu0 0.0
        %488 = vmatpush1.msra.mxu0 0.0
        %489 = vmatprep.subr.mxu0 0.0
        %490 = vmatpush1.msra.mxu0 0.0
        %491 = vmatprep.subr.mxu0 0.0
        %492 = vmatpush1.msra.mxu0 0.0
        %493 = vmatprep.subr.mxu0 0.0
        %494 = vmatpush1.msra.mxu0 0.0
        %495 = vmatprep.subr.mxu0 0.0
        %496 = vmatpush1.msra.mxu0 0.0
        %497 = vmatprep.subr.mxu0 0.0
        %498 = vmatpush1.msra.mxu0 0.0
        %499 = vmatprep.subr.mxu0 0.0
        %500 = vmatpush1.msra.mxu0 0.0
        %501 = vmatprep.subr.mxu0 0.0
        %502 = vmatpush1.msra.mxu0 0.0
        %503 = vmatprep.subr.mxu0 0.0
        %504 = vmatpush1.msra.mxu0 0.0
        %505 = vmatprep.subr.mxu0 0.0
        %506 = vmatpush1.msra.mxu0 0.0
        %507 = vmatprep.subr.mxu0 0.0
        %508 = vmatpush1.msra.mxu0 0.0
        %509 = vmatprep.subr.mxu0 0.0
        %510 = vmatpush1.msra.mxu0 0.0
        %511 = vmatprep.subr.mxu0 0.0
        %512 = vmatpush1.msra.mxu0 0.0
        %513 = vmatprep.subr.mxu0 0.0
        %514 = vmatpush1.msra.mxu0 0.0
        %515 = vmatprep.subr.mxu0 0.0
        %516 = vmatpush1.msra.mxu0 0.0
        %517 = vmatprep.subr.mxu0 0.0
        %518 = vmatpush1.msra.mxu0 0.0
        %519 = vmatprep.subr.mxu0 0.0
        %520 = vmatpush1.msra.mxu0 0.0
        %521 = vmatprep.subr.mxu0 0.0
        %522 = vmatpush1.msra.mxu0 0.0
        %523 = vmatprep.subr.mxu0 0.0
        %524 = vmatpush1.msra.mxu0 0.0
        %525 = vmatprep.subr.mxu0 0.0
        %526 = vmatpush1.msra.mxu0 0.0
        %527 = vmatprep.subr.mxu0 0.0
        %528 = vmatpush1.msra.mxu0 0.0
        %529 = vmatprep.subr.mxu0 0.0
        %530 = vmatpush1.msra.mxu0 0.0
        %531 = vmatprep.subr.mxu0 0.0
        %532 = vmatpush1.msra.mxu0 0.0
        %533 = vmatprep.mubr.f32.mxu0 0.0
        %534 = vmatmul.mubr.f32.gmra.mrb[0].mxu0 %v467
        %v535 = vpop.f32.mrb[0].mxu0
        %v536 = vadd.f32 %v464, %v535
        %v537 = vpop.f32.mrb[0].mxu0
        %538 = vdwg.mxu0
        %s539 = scalar_lea.vmem %s3, 64
        %v540 = vld [vmem:[%s539] sm:$0xff]
        %v541 = vld [vmem:[%s539 + $0x8] sm:$0xff]
        %v542 = vld [vmem:[%s539 + $0x10] sm:$0xff]
        %v543 = vld [vmem:[%s539 + $0x18] sm:$0xff]
        %s544 = scalar_lea.vmem %s4, 2
        %v545 = vld [vmem:[%s544] sm:$0x1]
        %v547 = vlaneseq
        %v548 = vshrl.u32 %v547, 7
        %v549 = vsub.s32 0, %v548
        %v550 = vrot.slane %v545, %v549
        %v553 = vsel %vm379, %v367, 0
        %555 = vmatprep.subr.mxu0 0.0
        %556 = vmatpush1.msra.mxu0 %v540
        %557 = vmatprep.subr.mxu0 0.0
        %558 = vmatpush1.msra.mxu0 %v541
        %559 = vmatprep.subr.mxu0 0.0
        %560 = vmatpush1.msra.mxu0 %v542
        %561 = vmatprep.subr.mxu0 0.0
        %562 = vmatpush1.msra.mxu0 %v543
        %563 = vmatprep.subr.mxu0 0.0
        %564 = vmatpush1.msra.mxu0 0.0
        %565 = vmatprep.subr.mxu0 0.0
        %566 = vmatpush1.msra.mxu0 0.0
        %567 = vmatprep.subr.mxu0 0.0
        %568 = vmatpush1.msra.mxu0 0.0
        %569 = vmatprep.subr.mxu0 0.0
        %570 = vmatpush1.msra.mxu0 0.0
        %571 = vmatprep.subr.mxu0 0.0
        %572 = vmatpush1.msra.mxu0 0.0
        %573 = vmatprep.subr.mxu0 0.0
        %574 = vmatpush1.msra.mxu0 0.0
        %575 = vmatprep.subr.mxu0 0.0
        %576 = vmatpush1.msra.mxu0 0.0
        %577 = vmatprep.subr.mxu0 0.0
        %578 = vmatpush1.msra.mxu0 0.0
        %579 = vmatprep.subr.mxu0 0.0
        %580 = vmatpush1.msra.mxu0 0.0
        %581 = vmatprep.subr.mxu0 0.0
        %582 = vmatpush1.msra.mxu0 0.0
        %583 = vmatprep.subr.mxu0 0.0
        %584 = vmatpush1.msra.mxu0 0.0
        %585 = vmatprep.subr.mxu0 0.0
        %586 = vmatpush1.msra.mxu0 0.0
        %587 = vmatprep.subr.mxu0 0.0
        %588 = vmatpush1.msra.mxu0 0.0
        %589 = vmatprep.subr.mxu0 0.0
        %590 = vmatpush1.msra.mxu0 0.0
        %591 = vmatprep.subr.mxu0 0.0
        %592 = vmatpush1.msra.mxu0 0.0
        %593 = vmatprep.subr.mxu0 0.0
        %594 = vmatpush1.msra.mxu0 0.0
        %595 = vmatprep.subr.mxu0 0.0
        %596 = vmatpush1.msra.mxu0 0.0
        %597 = vmatprep.subr.mxu0 0.0
        %598 = vmatpush1.msra.mxu0 0.0
        %599 = vmatprep.subr.mxu0 0.0
        %600 = vmatpush1.msra.mxu0 0.0
        %601 = vmatprep.subr.mxu0 0.0
        %602 = vmatpush1.msra.mxu0 0.0
        %603 = vmatprep.subr.mxu0 0.0
        %604 = vmatpush1.msra.mxu0 0.0
        %605 = vmatprep.subr.mxu0 0.0
        %606 = vmatpush1.msra.mxu0 0.0
        %607 = vmatprep.subr.mxu0 0.0
        %608 = vmatpush1.msra.mxu0 0.0
        %609 = vmatprep.subr.mxu0 0.0
        %610 = vmatpush1.msra.mxu0 0.0
        %611 = vmatprep.subr.mxu0 0.0
        %612 = vmatpush1.msra.mxu0 0.0
        %613 = vmatprep.subr.mxu0 0.0
        %614 = vmatpush1.msra.mxu0 0.0
        %615 = vmatprep.subr.mxu0 0.0
        %616 = vmatpush1.msra.mxu0 0.0
        %617 = vmatprep.subr.mxu0 0.0
        %618 = vmatpush1.msra.mxu0 0.0
        %619 = vmatprep.mubr.f32.mxu0 0.0
        %620 = vmatmul.mubr.f32.gmra.mrb[0].mxu0 %v553
        %v621 = vpop.f32.mrb[0].mxu0
        %v622 = vadd.f32 %v550, %v621
        %v623 = vpop.f32.mrb[0].mxu0
        %624 = vdwg.mxu0
        %v625 = vld [vmem:[%s5] sm:$0xff]
        %v626 = vld [vmem:[%s5 + $0x8] sm:$0xff]
        %v627 = vld [vmem:[%s5 + $0x10] sm:$0xff]
        %v628 = vld [vmem:[%s5 + $0x18] sm:$0xff]
        %v629 = vld [vmem:[%s5 + $0x20] sm:$0xff]
        %v630 = vld [vmem:[%s5 + $0x28] sm:$0xff]
        %v631 = vld [vmem:[%s5 + $0x30] sm:$0xff]
        %v632 = vld [vmem:[%s5 + $0x38] sm:$0xff]
        %vm633 = vcmask 130048
        %v635 = vsel %vm633, %v450, 0
        %v638 = vsel %vm633, %v536, 0
        %640 = vmatprep.subr.mxu0 0.0
        %641 = vmatpush1.xpose.msra.mxu0 %v638
        %642 = vmatprep.subr.mxu0 0.0
        %643 = vmatpush1.xpose.msra.mxu0 0.0
        %644 = vmatprep.subr.mxu0 0.0
        %645 = vmatpush1.xpose.msra.mxu0 0.0
        %646 = vmatprep.subr.mxu0 0.0
        %647 = vmatpush1.xpose.msra.mxu0 0.0
        %648 = vmatprep.subr.mxu0 0.0
        %649 = vmatpush1.xpose.msra.mxu0 0.0
        %650 = vmatprep.subr.mxu0 0.0
        %651 = vmatpush1.xpose.msra.mxu0 0.0
        %652 = vmatprep.subr.mxu0 0.0
        %653 = vmatpush1.xpose.msra.mxu0 0.0
        %654 = vmatprep.subr.mxu0 0.0
        %655 = vmatpush1.xpose.msra.mxu0 0.0
        %656 = vmatprep.subr.mxu0 0.0
        %657 = vmatpush1.xpose.msra.mxu0 0.0
        %658 = vmatprep.subr.mxu0 0.0
        %659 = vmatpush1.xpose.msra.mxu0 0.0
        %660 = vmatprep.subr.mxu0 0.0
        %661 = vmatpush1.xpose.msra.mxu0 0.0
        %662 = vmatprep.subr.mxu0 0.0
        %663 = vmatpush1.xpose.msra.mxu0 0.0
        %664 = vmatprep.subr.mxu0 0.0
        %665 = vmatpush1.xpose.msra.mxu0 0.0
        %666 = vmatprep.subr.mxu0 0.0
        %667 = vmatpush1.xpose.msra.mxu0 0.0
        %668 = vmatprep.subr.mxu0 0.0
        %669 = vmatpush1.xpose.msra.mxu0 0.0
        %670 = vmatprep.subr.mxu0 0.0
        %671 = vmatpush1.xpose.msra.mxu0 0.0
        %672 = vmatprep.subr.mxu0 0.0
        %673 = vmatpush1.xpose.msra.mxu0 0.0
        %674 = vmatprep.subr.mxu0 0.0
        %675 = vmatpush1.xpose.msra.mxu0 0.0
        %676 = vmatprep.subr.mxu0 0.0
        %677 = vmatpush1.xpose.msra.mxu0 0.0
        %678 = vmatprep.subr.mxu0 0.0
        %679 = vmatpush1.xpose.msra.mxu0 0.0
        %680 = vmatprep.subr.mxu0 0.0
        %681 = vmatpush1.xpose.msra.mxu0 0.0
        %682 = vmatprep.subr.mxu0 0.0
        %683 = vmatpush1.xpose.msra.mxu0 0.0
        %684 = vmatprep.subr.mxu0 0.0
        %685 = vmatpush1.xpose.msra.mxu0 0.0
        %686 = vmatprep.subr.mxu0 0.0
        %687 = vmatpush1.xpose.msra.mxu0 0.0
        %688 = vmatprep.subr.mxu0 0.0
        %689 = vmatpush1.xpose.msra.mxu0 0.0
        %690 = vmatprep.subr.mxu0 0.0
        %691 = vmatpush1.xpose.msra.mxu0 0.0
        %692 = vmatprep.subr.mxu0 0.0
        %693 = vmatpush1.xpose.msra.mxu0 0.0
        %694 = vmatprep.subr.mxu0 0.0
        %695 = vmatpush1.xpose.msra.mxu0 0.0
        %696 = vmatprep.subr.mxu0 0.0
        %697 = vmatpush1.xpose.msra.mxu0 0.0
        %698 = vmatprep.subr.mxu0 0.0
        %699 = vmatpush1.xpose.msra.mxu0 0.0
        %700 = vmatprep.subr.mxu0 0.0
        %701 = vmatpush1.xpose.msra.mxu0 0.0
        %702 = vmatprep.subr.mxu0 0.0
        %703 = vmatpush1.xpose.msra.mxu0 0.0
        %704 = vmatprep.mubr.f32.mxu0 0.0
        %705 = vmatmul.mubr.f32.gmra.mrb[0].mxu0 %v635
        %v706 = vpop.f32.mrb[0].mxu0
        %v707 = vadd.f32 0.0, %v706
        %v708 = vpop.f32.mrb[0].mxu0
        %709 = vdwg.mxu0
        %vm710 = vcmask 64512
        %v711 = vsel %vm710, %v707, -inf
        %712 = vmax.xlane.f32.xlu0 %v711
        %v713 = vpop.xlane.xlu0 %712
        %v714 = vsub.f32 %v707, %v713
        %v715 = vmul.f32 %v714, 1.442695
        %v716 = vpow.pop %v715
        %v717 = vsel %vm710, %v716, 0.0
        %718 = vadd.xlane.f32.xlu0 %v717
        %v719 = vpop.xlane.xlu0 %718
        %v720 = vrcp.pop %v719
        %v721 = vmul.f32 %v716, %v720
        %v723 = vsel %vm710, %v721, 0
        %725 = vmatprep.subr.mxu0 0.0
        %726 = vmatpush1.msra.mxu0 %v622
        %727 = vmatprep.subr.mxu0 0.0
        %728 = vmatpush1.msra.mxu0 0.0
        %729 = vmatprep.subr.mxu0 0.0
        %730 = vmatpush1.msra.mxu0 0.0
        %731 = vmatprep.subr.mxu0 0.0
        %732 = vmatpush1.msra.mxu0 0.0
        %733 = vmatprep.subr.mxu0 0.0
        %734 = vmatpush1.msra.mxu0 0.0
        %735 = vmatprep.subr.mxu0 0.0
        %736 = vmatpush1.msra.mxu0 0.0
        %737 = vmatprep.subr.mxu0 0.0
        %738 = vmatpush1.msra.mxu0 0.0
        %739 = vmatprep.subr.mxu0 0.0
        %740 = vmatpush1.msra.mxu0 0.0
        %741 = vmatprep.subr.mxu0 0.0
        %742 = vmatpush1.msra.mxu0 0.0
        %743 = vmatprep.subr.mxu0 0.0
        %744 = vmatpush1.msra.mxu0 0.0
        %745 = vmatprep.subr.mxu0 0.0
        %746 = vmatpush1.msra.mxu0 0.0
        %747 = vmatprep.subr.mxu0 0.0
        %748 = vmatpush1.msra.mxu0 0.0
        %749 = vmatprep.subr.mxu0 0.0
        %750 = vmatpush1.msra.mxu0 0.0
        %751 = vmatprep.subr.mxu0 0.0
        %752 = vmatpush1.msra.mxu0 0.0
        %753 = vmatprep.subr.mxu0 0.0
        %754 = vmatpush1.msra.mxu0 0.0
        %755 = vmatprep.subr.mxu0 0.0
        %756 = vmatpush1.msra.mxu0 0.0
        %757 = vmatprep.subr.mxu0 0.0
        %758 = vmatpush1.msra.mxu0 0.0
        %759 = vmatprep.subr.mxu0 0.0
        %760 = vmatpush1.msra.mxu0 0.0
        %761 = vmatprep.subr.mxu0 0.0
        %762 = vmatpush1.msra.mxu0 0.0
        %763 = vmatprep.subr.mxu0 0.0
        %764 = vmatpush1.msra.mxu0 0.0
        %765 = vmatprep.subr.mxu0 0.0
        %766 = vmatpush1.msra.mxu0 0.0
        %767 = vmatprep.subr.mxu0 0.0
        %768 = vmatpush1.msra.mxu0 0.0
        %769 = vmatprep.subr.mxu0 0.0
        %770 = vmatpush1.msra.mxu0 0.0
        %771 = vmatprep.subr.mxu0 0.0
        %772 = vmatpush1.msra.mxu0 0.0
        %773 = vmatprep.subr.mxu0 0.0
        %774 = vmatpush1.msra.mxu0 0.0
        %775 = vmatprep.subr.mxu0 0.0
        %776 = vmatpush1.msra.mxu0 0.0
        %777 = vmatprep.subr.mxu0 0.0
        %778 = vmatpush1.msra.mxu0 0.0
        %779 = vmatprep.subr.mxu0 0.0
        %780 = vmatpush1.msra.mxu0 0.0
        %781 = vmatprep.subr.mxu0 0.0
        %782 = vmatpush1.msra.mxu0 0.0
        %783 = vmatprep.subr.mxu0 0.0
        %784 = vmatpush1.msra.mxu0 0.0
        %785 = vmatprep.subr.mxu0 0.0
        %786 = vmatpush1.msra.mxu0 0.0
        %787 = vmatprep.subr.mxu0 0.0
        %788 = vmatpush1.msra.mxu0 0.0
        %789 = vmatprep.mubr.f32.mxu0 0.0
        %790 = vmatmul.mubr.f32.gmra.mrb[0].mxu0 %v723
        %v791 = vpop.f32.mrb[0].mxu0
        %v792 = vadd.f32 0.0, %v791
        %v793 = vpop.f32.mrb[0].mxu0
        %794 = vdwg.mxu0
        %795 = vrot.lane.b32.xlu0 %v450, 112
        %v796 = vpop.permute.xlu0 %795
        %797 = vrot.lane.b32.xlu0 %v536, 112
        %v798 = vpop.permute.xlu0 %797
        %v799 = vsel %vm633, %v796, 0
        %v801 = vsel %vm633, %v798, 0
        %803 = vmatprep.subr.mxu0 0.0
        %804 = vmatpush1.xpose.msra.mxu0 %v801
        %805 = vmatprep.subr.mxu0 0.0
        %806 = vmatpush1.xpose.msra.mxu0 0.0
        %807 = vmatprep.subr.mxu0 0.0
        %808 = vmatpush1.xpose.msra.mxu0 0.0
        %809 = vmatprep.subr.mxu0 0.0
        %810 = vmatpush1.xpose.msra.mxu0 0.0
        %811 = vmatprep.subr.mxu0 0.0
        %812 = vmatpush1.xpose.msra.mxu0 0.0
        %813 = vmatprep.subr.mxu0 0.0
        %814 = vmatpush1.xpose.msra.mxu0 0.0
        %815 = vmatprep.subr.mxu0 0.0
        %816 = vmatpush1.xpose.msra.mxu0 0.0
        %817 = vmatprep.subr.mxu0 0.0
        %818 = vmatpush1.xpose.msra.mxu0 0.0
        %819 = vmatprep.subr.mxu0 0.0
        %820 = vmatpush1.xpose.msra.mxu0 0.0
        %821 = vmatprep.subr.mxu0 0.0
        %822 = vmatpush1.xpose.msra.mxu0 0.0
        %823 = vmatprep.subr.mxu0 0.0
        %824 = vmatpush1.xpose.msra.mxu0 0.0
        %825 = vmatprep.subr.mxu0 0.0
        %826 = vmatpush1.xpose.msra.mxu0 0.0
        %827 = vmatprep.subr.mxu0 0.0
        %828 = vmatpush1.xpose.msra.mxu0 0.0
        %829 = vmatprep.subr.mxu0 0.0
        %830 = vmatpush1.xpose.msra.mxu0 0.0
        %831 = vmatprep.subr.mxu0 0.0
        %832 = vmatpush1.xpose.msra.mxu0 0.0
        %833 = vmatprep.subr.mxu0 0.0
        %834 = vmatpush1.xpose.msra.mxu0 0.0
        %835 = vmatprep.subr.mxu0 0.0
        %836 = vmatpush1.xpose.msra.mxu0 0.0
        %837 = vmatprep.subr.mxu0 0.0
        %838 = vmatpush1.xpose.msra.mxu0 0.0
        %839 = vmatprep.subr.mxu0 0.0
        %840 = vmatpush1.xpose.msra.mxu0 0.0
        %841 = vmatprep.subr.mxu0 0.0
        %842 = vmatpush1.xpose.msra.mxu0 0.0
        %843 = vmatprep.subr.mxu0 0.0
        %844 = vmatpush1.xpose.msra.mxu0 0.0
        %845 = vmatprep.subr.mxu0 0.0
        %846 = vmatpush1.xpose.msra.mxu0 0.0
        %847 = vmatprep.subr.mxu0 0.0
        %848 = vmatpush1.xpose.msra.mxu0 0.0
        %849 = vmatprep.subr.mxu0 0.0
        %850 = vmatpush1.xpose.msra.mxu0 0.0
        %851 = vmatprep.subr.mxu0 0.0
        %852 = vmatpush1.xpose.msra.mxu0 0.0
        %853 = vmatprep.subr.mxu0 0.0
        %854 = vmatpush1.xpose.msra.mxu0 0.0
        %855 = vmatprep.subr.mxu0 0.0
        %856 = vmatpush1.xpose.msra.mxu0 0.0
        %857 = vmatprep.subr.mxu0 0.0
        %858 = vmatpush1.xpose.msra.mxu0 0.0
        %859 = vmatprep.subr.mxu0 0.0
        %860 = vmatpush1.xpose.msra.mxu0 0.0
        %861 = vmatprep.subr.mxu0 0.0
        %862 = vmatpush1.xpose.msra.mxu0 0.0
        %863 = vmatprep.subr.mxu0 0.0
        %864 = vmatpush1.xpose.msra.mxu0 0.0
        %865 = vmatprep.subr.mxu0 0.0
        %866 = vmatpush1.xpose.msra.mxu0 0.0
        %867 = vmatprep.mubr.f32.mxu0 0.0
        %868 = vmatmul.mubr.f32.gmra.mrb[0].mxu0 %v799
        %v869 = vpop.f32.mrb[0].mxu0
        %v870 = vadd.f32 0.0, %v869
        %v871 = vpop.f32.mrb[0].mxu0
        %872 = vdwg.mxu0
        %v873 = vsel %vm710, %v870, -inf
        %874 = vmax.xlane.f32.xlu0 %v873
        %v875 = vpop.xlane.xlu0 %874
        %v876 = vsub.f32 %v870, %v875
        %v877 = vmul.f32 %v876, 1.442695
        %v878 = vpow.pop %v877
        %v879 = vsel %vm710, %v878, 0.0
        %880 = vadd.xlane.f32.xlu0 %v879
        %v881 = vpop.xlane.xlu0 %880
        %v882 = vrcp.pop %v881
        %v883 = vmul.f32 %v878, %v882
        %885 = vrot.lane.b32.xlu0 %v622, 112
        %v886 = vpop.permute.xlu0 %885
        %v889 = vsel %vm710, %v883, 0
        %891 = vmatprep.subr.mxu0 0.0
        %892 = vmatpush1.msra.mxu0 %v886
        %893 = vmatprep.subr.mxu0 0.0
        %894 = vmatpush1.msra.mxu0 0.0
        %895 = vmatprep.subr.mxu0 0.0
        %896 = vmatpush1.msra.mxu0 0.0
        %897 = vmatprep.subr.mxu0 0.0
        %898 = vmatpush1.msra.mxu0 0.0
        %899 = vmatprep.subr.mxu0 0.0
        %900 = vmatpush1.msra.mxu0 0.0
        %901 = vmatprep.subr.mxu0 0.0
        %902 = vmatpush1.msra.mxu0 0.0
        %903 = vmatprep.subr.mxu0 0.0
        %904 = vmatpush1.msra.mxu0 0.0
        %905 = vmatprep.subr.mxu0 0.0
        %906 = vmatpush1.msra.mxu0 0.0
        %907 = vmatprep.subr.mxu0 0.0
        %908 = vmatpush1.msra.mxu0 0.0
        %909 = vmatprep.subr.mxu0 0.0
        %910 = vmatpush1.msra.mxu0 0.0
        %911 = vmatprep.subr.mxu0 0.0
        %912 = vmatpush1.msra.mxu0 0.0
        %913 = vmatprep.subr.mxu0 0.0
        %914 = vmatpush1.msra.mxu0 0.0
        %915 = vmatprep.subr.mxu0 0.0
        %916 = vmatpush1.msra.mxu0 0.0
        %917 = vmatprep.subr.mxu0 0.0
        %918 = vmatpush1.msra.mxu0 0.0
        %919 = vmatprep.subr.mxu0 0.0
        %920 = vmatpush1.msra.mxu0 0.0
        %921 = vmatprep.subr.mxu0 0.0
        %922 = vmatpush1.msra.mxu0 0.0
        %923 = vmatprep.subr.mxu0 0.0
        %924 = vmatpush1.msra.mxu0 0.0
        %925 = vmatprep.subr.mxu0 0.0
        %926 = vmatpush1.msra.mxu0 0.0
        %927 = vmatprep.subr.mxu0 0.0
        %928 = vmatpush1.msra.mxu0 0.0
        %929 = vmatprep.subr.mxu0 0.0
        %930 = vmatpush1.msra.mxu0 0.0
        %931 = vmatprep.subr.mxu0 0.0
        %932 = vmatpush1.msra.mxu0 0.0
        %933 = vmatprep.subr.mxu0 0.0
        %934 = vmatpush1.msra.mxu0 0.0
        %935 = vmatprep.subr.mxu0 0.0
        %936 = vmatpush1.msra.mxu0 0.0
        %937 = vmatprep.subr.mxu0 0.0
        %938 = vmatpush1.msra.mxu0 0.0
        %939 = vmatprep.subr.mxu0 0.0
        %940 = vmatpush1.msra.mxu0 0.0
        %941 = vmatprep.subr.mxu0 0.0
        %942 = vmatpush1.msra.mxu0 0.0
        %943 = vmatprep.subr.mxu0 0.0
        %944 = vmatpush1.msra.mxu0 0.0
        %945 = vmatprep.subr.mxu0 0.0
        %946 = vmatpush1.msra.mxu0 0.0
        %947 = vmatprep.subr.mxu0 0.0
        %948 = vmatpush1.msra.mxu0 0.0
        %949 = vmatprep.subr.mxu0 0.0
        %950 = vmatpush1.msra.mxu0 0.0
        %951 = vmatprep.subr.mxu0 0.0
        %952 = vmatpush1.msra.mxu0 0.0
        %953 = vmatprep.subr.mxu0 0.0
        %954 = vmatpush1.msra.mxu0 0.0
        %955 = vmatprep.mubr.f32.mxu0 0.0
        %956 = vmatmul.mubr.f32.gmra.mrb[0].mxu0 %v889
        %v957 = vpop.f32.mrb[0].mxu0
        %v958 = vadd.f32 0.0, %v957
        %v959 = vpop.f32.mrb[0].mxu0
        %960 = vdwg.mxu0
        %v962 = vsel %vm633, %v958, 0
        %964 = vmatprep.subr.mxu0 0.0
        %965 = vmatpush1.msra.mxu0 %v627
        %966 = vmatprep.subr.mxu0 0.0
        %967 = vmatpush1.msra.mxu0 %v628
        %968 = vmatprep.subr.mxu0 0.0
        %969 = vmatpush1.msra.mxu0 0.0
        %970 = vmatprep.subr.mxu0 0.0
        %971 = vmatpush1.msra.mxu0 0.0
        %972 = vmatprep.subr.mxu0 0.0
        %973 = vmatpush1.msra.mxu0 0.0
        %974 = vmatprep.subr.mxu0 0.0
        %975 = vmatpush1.msra.mxu0 0.0
        %976 = vmatprep.subr.mxu0 0.0
        %977 = vmatpush1.msra.mxu0 0.0
        %978 = vmatprep.subr.mxu0 0.0
        %979 = vmatpush1.msra.mxu0 0.0
        %980 = vmatprep.subr.mxu0 0.0
        %981 = vmatpush1.msra.mxu0 0.0
        %982 = vmatprep.subr.mxu0 0.0
        %983 = vmatpush1.msra.mxu0 0.0
        %984 = vmatprep.subr.mxu0 0.0
        %985 = vmatpush1.msra.mxu0 0.0
        %986 = vmatprep.subr.mxu0 0.0
        %987 = vmatpush1.msra.mxu0 0.0
        %988 = vmatprep.subr.mxu0 0.0
        %989 = vmatpush1.msra.mxu0 0.0
        %990 = vmatprep.subr.mxu0 0.0
        %991 = vmatpush1.msra.mxu0 0.0
        %992 = vmatprep.subr.mxu0 0.0
        %993 = vmatpush1.msra.mxu0 0.0
        %994 = vmatprep.subr.mxu0 0.0
        %995 = vmatpush1.msra.mxu0 0.0
        %996 = vmatprep.subr.mxu0 0.0
        %997 = vmatpush1.msra.mxu0 0.0
        %998 = vmatprep.subr.mxu0 0.0
        %999 = vmatpush1.msra.mxu0 0.0
        %1000 = vmatprep.subr.mxu0 0.0
        %1001 = vmatpush1.msra.mxu0 0.0
        %1002 = vmatprep.subr.mxu0 0.0
        %1003 = vmatpush1.msra.mxu0 0.0
        %1004 = vmatprep.subr.mxu0 0.0
        %1005 = vmatpush1.msra.mxu0 0.0
        %1006 = vmatprep.subr.mxu0 0.0
        %1007 = vmatpush1.msra.mxu0 0.0
        %1008 = vmatprep.subr.mxu0 0.0
        %1009 = vmatpush1.msra.mxu0 0.0
        %1010 = vmatprep.subr.mxu0 0.0
        %1011 = vmatpush1.msra.mxu0 0.0
        %1012 = vmatprep.subr.mxu0 0.0
        %1013 = vmatpush1.msra.mxu0 0.0
        %1014 = vmatprep.subr.mxu0 0.0
        %1015 = vmatpush1.msra.mxu0 0.0
        %1016 = vmatprep.subr.mxu0 0.0
        %1017 = vmatpush1.msra.mxu0 0.0
        %1018 = vmatprep.subr.mxu0 0.0
        %1019 = vmatpush1.msra.mxu0 0.0
        %1020 = vmatprep.subr.mxu0 0.0
        %1021 = vmatpush1.msra.mxu0 0.0
        %1022 = vmatprep.subr.mxu0 0.0
        %1023 = vmatpush1.msra.mxu0 0.0
        %1024 = vmatprep.subr.mxu0 0.0
        %1025 = vmatpush1.msra.mxu0 0.0
        %1026 = vmatprep.subr.mxu0 0.0
        %1027 = vmatpush1.msra.mxu0 0.0
        %1028 = vmatprep.mubr.f32.mxu0 0.0
        %1029 = vmatmul.mubr.f32.gmra.mrb[0].mxu0 %v962
        %v1030 = vpop.f32.mrb[0].mxu0
        %v1031 = vadd.f32 0.0, %v1030
        %v1032 = vpop.f32.mrb[0].mxu0
        %1033 = vdwg.mxu0
        %v1035 = vsel %vm633, %v792, 0
        %1037 = vmatprep.subr.mxu0 0.0
        %1038 = vmatpush1.msra.mxu0 %v625
        %1039 = vmatprep.subr.mxu0 0.0
        %1040 = vmatpush1.msra.mxu0 %v626
        %1041 = vmatprep.subr.mxu0 0.0
        %1042 = vmatpush1.msra.mxu0 0.0
        %1043 = vmatprep.subr.mxu0 0.0
        %1044 = vmatpush1.msra.mxu0 0.0
        %1045 = vmatprep.subr.mxu0 0.0
        %1046 = vmatpush1.msra.mxu0 0.0
        %1047 = vmatprep.subr.mxu0 0.0
        %1048 = vmatpush1.msra.mxu0 0.0
        %1049 = vmatprep.subr.mxu0 0.0
        %1050 = vmatpush1.msra.mxu0 0.0
        %1051 = vmatprep.subr.mxu0 0.0
        %1052 = vmatpush1.msra.mxu0 0.0
        %1053 = vmatprep.subr.mxu0 0.0
        %1054 = vmatpush1.msra.mxu0 0.0
        %1055 = vmatprep.subr.mxu0 0.0
        %1056 = vmatpush1.msra.mxu0 0.0
        %1057 = vmatprep.subr.mxu0 0.0
        %1058 = vmatpush1.msra.mxu0 0.0
        %1059 = vmatprep.subr.mxu0 0.0
        %1060 = vmatpush1.msra.mxu0 0.0
        %1061 = vmatprep.subr.mxu0 0.0
        %1062 = vmatpush1.msra.mxu0 0.0
        %1063 = vmatprep.subr.mxu0 0.0
        %1064 = vmatpush1.msra.mxu0 0.0
        %1065 = vmatprep.subr.mxu0 0.0
        %1066 = vmatpush1.msra.mxu0 0.0
        %1067 = vmatprep.subr.mxu0 0.0
        %1068 = vmatpush1.msra.mxu0 0.0
        %1069 = vmatprep.subr.mxu0 0.0
        %1070 = vmatpush1.msra.mxu0 0.0
        %1071 = vmatprep.subr.mxu0 0.0
        %1072 = vmatpush1.msra.mxu0 0.0
        %1073 = vmatprep.subr.mxu0 0.0
        %1074 = vmatpush1.msra.mxu0 0.0
        %1075 = vmatprep.subr.mxu0 0.0
        %1076 = vmatpush1.msra.mxu0 0.0
        %1077 = vmatprep.subr.mxu0 0.0
        %1078 = vmatpush1.msra.mxu0 0.0
        %1079 = vmatprep.subr.mxu0 0.0
        %1080 = vmatpush1.msra.mxu0 0.0
        %1081 = vmatprep.subr.mxu0 0.0
        %1082 = vmatpush1.msra.mxu0 0.0
        %1083 = vmatprep.subr.mxu0 0.0
        %1084 = vmatpush1.msra.mxu0 0.0
        %1085 = vmatprep.subr.mxu0 0.0
        %1086 = vmatpush1.msra.mxu0 0.0
        %1087 = vmatprep.subr.mxu0 0.0
        %1088 = vmatpush1.msra.mxu0 0.0
        %1089 = vmatprep.subr.mxu0 0.0
        %1090 = vmatpush1.msra.mxu0 0.0
        %1091 = vmatprep.subr.mxu0 0.0
        %1092 = vmatpush1.msra.mxu0 0.0
        %1093 = vmatprep.subr.mxu0 0.0
        %1094 = vmatpush1.msra.mxu0 0.0
        %1095 = vmatprep.subr.mxu0 0.0
        %1096 = vmatpush1.msra.mxu0 0.0
        %1097 = vmatprep.subr.mxu0 0.0
        %1098 = vmatpush1.msra.mxu0 0.0
        %1099 = vmatprep.subr.mxu0 0.0
        %1100 = vmatpush1.msra.mxu0 0.0
        %1101 = vmatprep.mubr.f32.mxu0 0.0
        %1102 = vmatmul.mubr.f32.gmra.mrb[0].mxu0 %v1035
        %v1103 = vpop.f32.mrb[0].mxu0
        %v1104 = vadd.f32 %v1031, %v1103
        %v1105 = vpop.f32.mrb[0].mxu0
        %1106 = vdwg.mxu0
        %1107 = vrot.lane.b32.xlu0 %v450, 96
        %v1108 = vpop.permute.xlu0 %1107
        %1109 = vrot.lane.b32.xlu0 %v536, 96
        %v1110 = vpop.permute.xlu0 %1109
        %v1111 = vsel %vm633, %v1108, 0
        %v1113 = vsel %vm633, %v1110, 0
        %1115 = vmatprep.subr.mxu0 0.0
        %1116 = vmatpush1.xpose.msra.mxu0 %v1113
        %1117 = vmatprep.subr.mxu0 0.0
        %1118 = vmatpush1.xpose.msra.mxu0 0.0
        %1119 = vmatprep.subr.mxu0 0.0
        %1120 = vmatpush1.xpose.msra.mxu0 0.0
        %1121 = vmatprep.subr.mxu0 0.0
        %1122 = vmatpush1.xpose.msra.mxu0 0.0
        %1123 = vmatprep.subr.mxu0 0.0
        %1124 = vmatpush1.xpose.msra.mxu0 0.0
        %1125 = vmatprep.subr.mxu0 0.0
        %1126 = vmatpush1.xpose.msra.mxu0 0.0
        %1127 = vmatprep.subr.mxu0 0.0
        %1128 = vmatpush1.xpose.msra.mxu0 0.0
        %1129 = vmatprep.subr.mxu0 0.0
        %1130 = vmatpush1.xpose.msra.mxu0 0.0
        %1131 = vmatprep.subr.mxu0 0.0
        %1132 = vmatpush1.xpose.msra.mxu0 0.0
        %1133 = vmatprep.subr.mxu0 0.0
        %1134 = vmatpush1.xpose.msra.mxu0 0.0
        %1135 = vmatprep.subr.mxu0 0.0
        %1136 = vmatpush1.xpose.msra.mxu0 0.0
        %1137 = vmatprep.subr.mxu0 0.0
        %1138 = vmatpush1.xpose.msra.mxu0 0.0
        %1139 = vmatprep.subr.mxu0 0.0
        %1140 = vmatpush1.xpose.msra.mxu0 0.0
        %1141 = vmatprep.subr.mxu0 0.0
        %1142 = vmatpush1.xpose.msra.mxu0 0.0
        %1143 = vmatprep.subr.mxu0 0.0
        %1144 = vmatpush1.xpose.msra.mxu0 0.0
        %1145 = vmatprep.subr.mxu0 0.0
        %1146 = vmatpush1.xpose.msra.mxu0 0.0
        %1147 = vmatprep.subr.mxu0 0.0
        %1148 = vmatpush1.xpose.msra.mxu0 0.0
        %1149 = vmatprep.subr.mxu0 0.0
        %1150 = vmatpush1.xpose.msra.mxu0 0.0
        %1151 = vmatprep.subr.mxu0 0.0
        %1152 = vmatpush1.xpose.msra.mxu0 0.0
        %1153 = vmatprep.subr.mxu0 0.0
        %1154 = vmatpush1.xpose.msra.mxu0 0.0
        %1155 = vmatprep.subr.mxu0 0.0
        %1156 = vmatpush1.xpose.msra.mxu0 0.0
        %1157 = vmatprep.subr.mxu0 0.0
        %1158 = vmatpush1.xpose.msra.mxu0 0.0
        %1159 = vmatprep.subr.mxu0 0.0
        %1160 = vmatpush1.xpose.msra.mxu0 0.0
        %1161 = vmatprep.subr.mxu0 0.0
        %1162 = vmatpush1.xpose.msra.mxu0 0.0
        %1163 = vmatprep.subr.mxu0 0.0
        %1164 = vmatpush1.xpose.msra.mxu0 0.0
        %1165 = vmatprep.subr.mxu0 0.0
        %1166 = vmatpush1.xpose.msra.mxu0 0.0
        %1167 = vmatprep.subr.mxu0 0.0
        %1168 = vmatpush1.xpose.msra.mxu0 0.0
        %1169 = vmatprep.subr.mxu0 0.0
        %1170 = vmatpush1.xpose.msra.mxu0 0.0
        %1171 = vmatprep.subr.mxu0 0.0
        %1172 = vmatpush1.xpose.msra.mxu0 0.0
        %1173 = vmatprep.subr.mxu0 0.0
        %1174 = vmatpush1.xpose.msra.mxu0 0.0
        %1175 = vmatprep.subr.mxu0 0.0
        %1176 = vmatpush1.xpose.msra.mxu0 0.0
        %1177 = vmatprep.subr.mxu0 0.0
        %1178 = vmatpush1.xpose.msra.mxu0 0.0
        %1179 = vmatprep.mubr.f32.mxu0 0.0
        %1180 = vmatmul.mubr.f32.gmra.mrb[0].mxu0 %v1111
        %v1181 = vpop.f32.mrb[0].mxu0
        %v1182 = vadd.f32 0.0, %v1181
        %v1183 = vpop.f32.mrb[0].mxu0
        %1184 = vdwg.mxu0
        %v1185 = vsel %vm710, %v1182, -inf
        %1186 = vmax.xlane.f32.xlu0 %v1185
        %v1187 = vpop.xlane.xlu0 %1186
        %v1188 = vsub.f32 %v1182, %v1187
        %v1189 = vmul.f32 %v1188, 1.442695
        %v1190 = vpow.pop %v1189
        %v1191 = vsel %vm710, %v1190, 0.0
        %1192 = vadd.xlane.f32.xlu0 %v1191
        %v1193 = vpop.xlane.xlu0 %1192
        %v1194 = vrcp.pop %v1193
        %v1195 = vmul.f32 %v1190, %v1194
        %1196 = vrot.lane.b32.xlu0 %v622, 96
        %v1197 = vpop.permute.xlu0 %1196
        %v1200 = vsel %vm710, %v1195, 0
        %1202 = vmatprep.subr.mxu0 0.0
        %1203 = vmatpush1.msra.mxu0 %v1197
        %1204 = vmatprep.subr.mxu0 0.0
        %1205 = vmatpush1.msra.mxu0 0.0
        %1206 = vmatprep.subr.mxu0 0.0
        %1207 = vmatpush1.msra.mxu0 0.0
        %1208 = vmatprep.subr.mxu0 0.0
        %1209 = vmatpush1.msra.mxu0 0.0
        %1210 = vmatprep.subr.mxu0 0.0
        %1211 = vmatpush1.msra.mxu0 0.0
        %1212 = vmatprep.subr.mxu0 0.0
        %1213 = vmatpush1.msra.mxu0 0.0
        %1214 = vmatprep.subr.mxu0 0.0
        %1215 = vmatpush1.msra.mxu0 0.0
        %1216 = vmatprep.subr.mxu0 0.0
        %1217 = vmatpush1.msra.mxu0 0.0
        %1218 = vmatprep.subr.mxu0 0.0
        %1219 = vmatpush1.msra.mxu0 0.0
        %1220 = vmatprep.subr.mxu0 0.0
        %1221 = vmatpush1.msra.mxu0 0.0
        %1222 = vmatprep.subr.mxu0 0.0
        %1223 = vmatpush1.msra.mxu0 0.0
        %1224 = vmatprep.subr.mxu0 0.0
        %1225 = vmatpush1.msra.mxu0 0.0
        %1226 = vmatprep.subr.mxu0 0.0
        %1227 = vmatpush1.msra.mxu0 0.0
        %1228 = vmatprep.subr.mxu0 0.0
        %1229 = vmatpush1.msra.mxu0 0.0
        %1230 = vmatprep.subr.mxu0 0.0
        %1231 = vmatpush1.msra.mxu0 0.0
        %1232 = vmatprep.subr.mxu0 0.0
        %1233 = vmatpush1.msra.mxu0 0.0
        %1234 = vmatprep.subr.mxu0 0.0
        %1235 = vmatpush1.msra.mxu0 0.0
        %1236 = vmatprep.subr.mxu0 0.0
        %1237 = vmatpush1.msra.mxu0 0.0
        %1238 = vmatprep.subr.mxu0 0.0
        %1239 = vmatpush1.msra.mxu0 0.0
        %1240 = vmatprep.subr.mxu0 0.0
        %1241 = vmatpush1.msra.mxu0 0.0
        %1242 = vmatprep.subr.mxu0 0.0
        %1243 = vmatpush1.msra.mxu0 0.0
        %1244 = vmatprep.subr.mxu0 0.0
        %1245 = vmatpush1.msra.mxu0 0.0
        %1246 = vmatprep.subr.mxu0 0.0
        %1247 = vmatpush1.msra.mxu0 0.0
        %1248 = vmatprep.subr.mxu0 0.0
        %1249 = vmatpush1.msra.mxu0 0.0
        %1250 = vmatprep.subr.mxu0 0.0
        %1251 = vmatpush1.msra.mxu0 0.0
        %1252 = vmatprep.subr.mxu0 0.0
        %1253 = vmatpush1.msra.mxu0 0.0
        %1254 = vmatprep.subr.mxu0 0.0
        %1255 = vmatpush1.msra.mxu0 0.0
        %1256 = vmatprep.subr.mxu0 0.0
        %1257 = vmatpush1.msra.mxu0 0.0
        %1258 = vmatprep.subr.mxu0 0.0
        %1259 = vmatpush1.msra.mxu0 0.0
        %1260 = vmatprep.subr.mxu0 0.0
        %1261 = vmatpush1.msra.mxu0 0.0
        %1262 = vmatprep.subr.mxu0 0.0
        %1263 = vmatpush1.msra.mxu0 0.0
        %1264 = vmatprep.subr.mxu0 0.0
        %1265 = vmatpush1.msra.mxu0 0.0
        %1266 = vmatprep.mubr.f32.mxu0 0.0
        %1267 = vmatmul.mubr.f32.gmra.mrb[0].mxu0 %v1200
        %v1268 = vpop.f32.mrb[0].mxu0
        %v1269 = vadd.f32 0.0, %v1268
        %v1270 = vpop.f32.mrb[0].mxu0
        %1271 = vdwg.mxu0
        %v1273 = vsel %vm633, %v1269, 0
        %1275 = vmatprep.subr.mxu0 0.0
        %1276 = vmatpush1.msra.mxu0 %v629
        %1277 = vmatprep.subr.mxu0 0.0
        %1278 = vmatpush1.msra.mxu0 %v630
        %1279 = vmatprep.subr.mxu0 0.0
        %1280 = vmatpush1.msra.mxu0 0.0
        %1281 = vmatprep.subr.mxu0 0.0
        %1282 = vmatpush1.msra.mxu0 0.0
        %1283 = vmatprep.subr.mxu0 0.0
        %1284 = vmatpush1.msra.mxu0 0.0
        %1285 = vmatprep.subr.mxu0 0.0
        %1286 = vmatpush1.msra.mxu0 0.0
        %1287 = vmatprep.subr.mxu0 0.0
        %1288 = vmatpush1.msra.mxu0 0.0
        %1289 = vmatprep.subr.mxu0 0.0
        %1290 = vmatpush1.msra.mxu0 0.0
        %1291 = vmatprep.subr.mxu0 0.0
        %1292 = vmatpush1.msra.mxu0 0.0
        %1293 = vmatprep.subr.mxu0 0.0
        %1294 = vmatpush1.msra.mxu0 0.0
        %1295 = vmatprep.subr.mxu0 0.0
        %1296 = vmatpush1.msra.mxu0 0.0
        %1297 = vmatprep.subr.mxu0 0.0
        %1298 = vmatpush1.msra.mxu0 0.0
        %1299 = vmatprep.subr.mxu0 0.0
        %1300 = vmatpush1.msra.mxu0 0.0
        %1301 = vmatprep.subr.mxu0 0.0
        %1302 = vmatpush1.msra.mxu0 0.0
        %1303 = vmatprep.subr.mxu0 0.0
        %1304 = vmatpush1.msra.mxu0 0.0
        %1305 = vmatprep.subr.mxu0 0.0
        %1306 = vmatpush1.msra.mxu0 0.0
        %1307 = vmatprep.subr.mxu0 0.0
        %1308 = vmatpush1.msra.mxu0 0.0
        %1309 = vmatprep.subr.mxu0 0.0
        %1310 = vmatpush1.msra.mxu0 0.0
        %1311 = vmatprep.subr.mxu0 0.0
        %1312 = vmatpush1.msra.mxu0 0.0
        %1313 = vmatprep.subr.mxu0 0.0
        %1314 = vmatpush1.msra.mxu0 0.0
        %1315 = vmatprep.subr.mxu0 0.0
        %1316 = vmatpush1.msra.mxu0 0.0
        %1317 = vmatprep.subr.mxu0 0.0
        %1318 = vmatpush1.msra.mxu0 0.0
        %1319 = vmatprep.subr.mxu0 0.0
        %1320 = vmatpush1.msra.mxu0 0.0
        %1321 = vmatprep.subr.mxu0 0.0
        %1322 = vmatpush1.msra.mxu0 0.0
        %1323 = vmatprep.subr.mxu0 0.0
        %1324 = vmatpush1.msra.mxu0 0.0
        %1325 = vmatprep.subr.mxu0 0.0
        %1326 = vmatpush1.msra.mxu0 0.0
        %1327 = vmatprep.subr.mxu0 0.0
        %1328 = vmatpush1.msra.mxu0 0.0
        %1329 = vmatprep.subr.mxu0 0.0
        %1330 = vmatpush1.msra.mxu0 0.0
        %1331 = vmatprep.subr.mxu0 0.0
        %1332 = vmatpush1.msra.mxu0 0.0
        %1333 = vmatprep.subr.mxu0 0.0
        %1334 = vmatpush1.msra.mxu0 0.0
        %1335 = vmatprep.subr.mxu0 0.0
        %1336 = vmatpush1.msra.mxu0 0.0
        %1337 = vmatprep.subr.mxu0 0.0
        %1338 = vmatpush1.msra.mxu0 0.0
        %1339 = vmatprep.mubr.f32.mxu0 0.0
        %1340 = vmatmul.mubr.f32.gmra.mrb[0].mxu0 %v1273
        %v1341 = vpop.f32.mrb[0].mxu0
        %v1342 = vadd.f32 0.0, %v1341
        %v1343 = vpop.f32.mrb[0].mxu0
        %1344 = vdwg.mxu0
        %v1345 = vadd.f32 %v1104, %v1342
        %1346 = vrot.lane.b32.xlu0 %v450, 80
        %v1347 = vpop.permute.xlu0 %1346
        %1348 = vrot.lane.b32.xlu0 %v536, 80
        %v1349 = vpop.permute.xlu0 %1348
        %v1350 = vsel %vm633, %v1347, 0
        %v1352 = vsel %vm633, %v1349, 0
        %1354 = vmatprep.subr.mxu0 0.0
        %1355 = vmatpush1.xpose.msra.mxu0 %v1352
        %1356 = vmatprep.subr.mxu0 0.0
        %1357 = vmatpush1.xpose.msra.mxu0 0.0
        %1358 = vmatprep.subr.mxu0 0.0
        %1359 = vmatpush1.xpose.msra.mxu0 0.0
        %1360 = vmatprep.subr.mxu0 0.0
        %1361 = vmatpush1.xpose.msra.mxu0 0.0
        %1362 = vmatprep.subr.mxu0 0.0
        %1363 = vmatpush1.xpose.msra.mxu0 0.0
        %1364 = vmatprep.subr.mxu0 0.0
        %1365 = vmatpush1.xpose.msra.mxu0 0.0
        %1366 = vmatprep.subr.mxu0 0.0
        %1367 = vmatpush1.xpose.msra.mxu0 0.0
        %1368 = vmatprep.subr.mxu0 0.0
        %1369 = vmatpush1.xpose.msra.mxu0 0.0
        %1370 = vmatprep.subr.mxu0 0.0
        %1371 = vmatpush1.xpose.msra.mxu0 0.0
        %1372 = vmatprep.subr.mxu0 0.0
        %1373 = vmatpush1.xpose.msra.mxu0 0.0
        %1374 = vmatprep.subr.mxu0 0.0
        %1375 = vmatpush1.xpose.msra.mxu0 0.0
        %1376 = vmatprep.subr.mxu0 0.0
        %1377 = vmatpush1.xpose.msra.mxu0 0.0
        %1378 = vmatprep.subr.mxu0 0.0
        %1379 = vmatpush1.xpose.msra.mxu0 0.0
        %1380 = vmatprep.subr.mxu0 0.0
        %1381 = vmatpush1.xpose.msra.mxu0 0.0
        %1382 = vmatprep.subr.mxu0 0.0
        %1383 = vmatpush1.xpose.msra.mxu0 0.0
        %1384 = vmatprep.subr.mxu0 0.0
        %1385 = vmatpush1.xpose.msra.mxu0 0.0
        %1386 = vmatprep.subr.mxu0 0.0
        %1387 = vmatpush1.xpose.msra.mxu0 0.0
        %1388 = vmatprep.subr.mxu0 0.0
        %1389 = vmatpush1.xpose.msra.mxu0 0.0
        %1390 = vmatprep.subr.mxu0 0.0
        %1391 = vmatpush1.xpose.msra.mxu0 0.0
        %1392 = vmatprep.subr.mxu0 0.0
        %1393 = vmatpush1.xpose.msra.mxu0 0.0
        %1394 = vmatprep.subr.mxu0 0.0
        %1395 = vmatpush1.xpose.msra.mxu0 0.0
        %1396 = vmatprep.subr.mxu0 0.0
        %1397 = vmatpush1.xpose.msra.mxu0 0.0
        %1398 = vmatprep.subr.mxu0 0.0
        %1399 = vmatpush1.xpose.msra.mxu0 0.0
        %1400 = vmatprep.subr.mxu0 0.0
        %1401 = vmatpush1.xpose.msra.mxu0 0.0
        %1402 = vmatprep.subr.mxu0 0.0
        %1403 = vmatpush1.xpose.msra.mxu0 0.0
        %1404 = vmatprep.subr.mxu0 0.0
        %1405 = vmatpush1.xpose.msra.mxu0 0.0
        %1406 = vmatprep.subr.mxu0 0.0
        %1407 = vmatpush1.xpose.msra.mxu0 0.0
        %1408 = vmatprep.subr.mxu0 0.0
        %1409 = vmatpush1.xpose.msra.mxu0 0.0
        %1410 = vmatprep.subr.mxu0 0.0
        %1411 = vmatpush1.xpose.msra.mxu0 0.0
        %1412 = vmatprep.subr.mxu0 0.0
        %1413 = vmatpush1.xpose.msra.mxu0 0.0
        %1414 = vmatprep.subr.mxu0 0.0
        %1415 = vmatpush1.xpose.msra.mxu0 0.0
        %1416 = vmatprep.subr.mxu0 0.0
        %1417 = vmatpush1.xpose.msra.mxu0 0.0
        %1418 = vmatprep.mubr.f32.mxu0 0.0
        %1419 = vmatmul.mubr.f32.gmra.mrb[0].mxu0 %v1350
        %v1420 = vpop.f32.mrb[0].mxu0
        %v1421 = vadd.f32 0.0, %v1420
        %v1422 = vpop.f32.mrb[0].mxu0
        %1423 = vdwg.mxu0
        %v1424 = vsel %vm710, %v1421, -inf
        %1425 = vmax.xlane.f32.xlu0 %v1424
        %v1426 = vpop.xlane.xlu0 %1425
        %v1427 = vsub.f32 %v1421, %v1426
        %v1428 = vmul.f32 %v1427, 1.442695
        %v1429 = vpow.pop %v1428
        %v1430 = vsel %vm710, %v1429, 0.0
        %1431 = vadd.xlane.f32.xlu0 %v1430
        %v1432 = vpop.xlane.xlu0 %1431
        %v1433 = vrcp.pop %v1432
        %v1434 = vmul.f32 %v1429, %v1433
        %1435 = vrot.lane.b32.xlu0 %v622, 80
        %v1436 = vpop.permute.xlu0 %1435
        %v1439 = vsel %vm710, %v1434, 0
        %1441 = vmatprep.subr.mxu0 0.0
        %1442 = vmatpush1.msra.mxu0 %v1436
        %1443 = vmatprep.subr.mxu0 0.0
        %1444 = vmatpush1.msra.mxu0 0.0
        %1445 = vmatprep.subr.mxu0 0.0
        %1446 = vmatpush1.msra.mxu0 0.0
        %1447 = vmatprep.subr.mxu0 0.0
        %1448 = vmatpush1.msra.mxu0 0.0
        %1449 = vmatprep.subr.mxu0 0.0
        %1450 = vmatpush1.msra.mxu0 0.0
        %1451 = vmatprep.subr.mxu0 0.0
        %1452 = vmatpush1.msra.mxu0 0.0
        %1453 = vmatprep.subr.mxu0 0.0
        %1454 = vmatpush1.msra.mxu0 0.0
        %1455 = vmatprep.subr.mxu0 0.0
        %1456 = vmatpush1.msra.mxu0 0.0
        %1457 = vmatprep.subr.mxu0 0.0
        %1458 = vmatpush1.msra.mxu0 0.0
        %1459 = vmatprep.subr.mxu0 0.0
        %1460 = vmatpush1.msra.mxu0 0.0
        %1461 = vmatprep.subr.mxu0 0.0
        %1462 = vmatpush1.msra.mxu0 0.0
        %1463 = vmatprep.subr.mxu0 0.0
        %1464 = vmatpush1.msra.mxu0 0.0
        %1465 = vmatprep.subr.mxu0 0.0
        %1466 = vmatpush1.msra.mxu0 0.0
        %1467 = vmatprep.subr.mxu0 0.0
        %1468 = vmatpush1.msra.mxu0 0.0
        %1469 = vmatprep.subr.mxu0 0.0
        %1470 = vmatpush1.msra.mxu0 0.0
        %1471 = vmatprep.subr.mxu0 0.0
        %1472 = vmatpush1.msra.mxu0 0.0
        %1473 = vmatprep.subr.mxu0 0.0
        %1474 = vmatpush1.msra.mxu0 0.0
        %1475 = vmatprep.subr.mxu0 0.0
        %1476 = vmatpush1.msra.mxu0 0.0
        %1477 = vmatprep.subr.mxu0 0.0
        %1478 = vmatpush1.msra.mxu0 0.0
        %1479 = vmatprep.subr.mxu0 0.0
        %1480 = vmatpush1.msra.mxu0 0.0
        %1481 = vmatprep.subr.mxu0 0.0
        %1482 = vmatpush1.msra.mxu0 0.0
        %1483 = vmatprep.subr.mxu0 0.0
        %1484 = vmatpush1.msra.mxu0 0.0
        %1485 = vmatprep.subr.mxu0 0.0
        %1486 = vmatpush1.msra.mxu0 0.0
        %1487 = vmatprep.subr.mxu0 0.0
        %1488 = vmatpush1.msra.mxu0 0.0
        %1489 = vmatprep.subr.mxu0 0.0
        %1490 = vmatpush1.msra.mxu0 0.0
        %1491 = vmatprep.subr.mxu0 0.0
        %1492 = vmatpush1.msra.mxu0 0.0
        %1493 = vmatprep.subr.mxu0 0.0
        %1494 = vmatpush1.msra.mxu0 0.0
        %1495 = vmatprep.subr.mxu0 0.0
        %1496 = vmatpush1.msra.mxu0 0.0
        %1497 = vmatprep.subr.mxu0 0.0
        %1498 = vmatpush1.msra.mxu0 0.0
        %1499 = vmatprep.subr.mxu0 0.0
        %1500 = vmatpush1.msra.mxu0 0.0
        %1501 = vmatprep.subr.mxu0 0.0
        %1502 = vmatpush1.msra.mxu0 0.0
        %1503 = vmatprep.subr.mxu0 0.0
        %1504 = vmatpush1.msra.mxu0 0.0
        %1505 = vmatprep.mubr.f32.mxu0 0.0
        %1506 = vmatmul.mubr.f32.gmra.mrb[0].mxu0 %v1439
        %v1507 = vpop.f32.mrb[0].mxu0
        %v1508 = vadd.f32 0.0, %v1507
        %v1509 = vpop.f32.mrb[0].mxu0
        %1510 = vdwg.mxu0
        %v1512 = vsel %vm633, %v1508, 0
        %1514 = vmatprep.subr.mxu0 0.0
        %1515 = vmatpush1.msra.mxu0 %v631
        %1516 = vmatprep.subr.mxu0 0.0
        %1517 = vmatpush1.msra.mxu0 %v632
        %1518 = vmatprep.subr.mxu0 0.0
        %1519 = vmatpush1.msra.mxu0 0.0
        %1520 = vmatprep.subr.mxu0 0.0
        %1521 = vmatpush1.msra.mxu0 0.0
        %1522 = vmatprep.subr.mxu0 0.0
        %1523 = vmatpush1.msra.mxu0 0.0
        %1524 = vmatprep.subr.mxu0 0.0
        %1525 = vmatpush1.msra.mxu0 0.0
        %1526 = vmatprep.subr.mxu0 0.0
        %1527 = vmatpush1.msra.mxu0 0.0
        %1528 = vmatprep.subr.mxu0 0.0
        %1529 = vmatpush1.msra.mxu0 0.0
        %1530 = vmatprep.subr.mxu0 0.0
        %1531 = vmatpush1.msra.mxu0 0.0
        %1532 = vmatprep.subr.mxu0 0.0
        %1533 = vmatpush1.msra.mxu0 0.0
        %1534 = vmatprep.subr.mxu0 0.0
        %1535 = vmatpush1.msra.mxu0 0.0
        %1536 = vmatprep.subr.mxu0 0.0
        %1537 = vmatpush1.msra.mxu0 0.0
        %1538 = vmatprep.subr.mxu0 0.0
        %1539 = vmatpush1.msra.mxu0 0.0
        %1540 = vmatprep.subr.mxu0 0.0
        %1541 = vmatpush1.msra.mxu0 0.0
        %1542 = vmatprep.subr.mxu0 0.0
        %1543 = vmatpush1.msra.mxu0 0.0
        %1544 = vmatprep.subr.mxu0 0.0
        %1545 = vmatpush1.msra.mxu0 0.0
        %1546 = vmatprep.subr.mxu0 0.0
        %1547 = vmatpush1.msra.mxu0 0.0
        %1548 = vmatprep.subr.mxu0 0.0
        %1549 = vmatpush1.msra.mxu0 0.0
        %1550 = vmatprep.subr.mxu0 0.0
        %1551 = vmatpush1.msra.mxu0 0.0
        %1552 = vmatprep.subr.mxu0 0.0
        %1553 = vmatpush1.msra.mxu0 0.0
        %1554 = vmatprep.subr.mxu0 0.0
        %1555 = vmatpush1.msra.mxu0 0.0
        %1556 = vmatprep.subr.mxu0 0.0
        %1557 = vmatpush1.msra.mxu0 0.0
        %1558 = vmatprep.subr.mxu0 0.0
        %1559 = vmatpush1.msra.mxu0 0.0
        %1560 = vmatprep.subr.mxu0 0.0
        %1561 = vmatpush1.msra.mxu0 0.0
        %1562 = vmatprep.subr.mxu0 0.0
        %1563 = vmatpush1.msra.mxu0 0.0
        %1564 = vmatprep.subr.mxu0 0.0
        %1565 = vmatpush1.msra.mxu0 0.0
        %1566 = vmatprep.subr.mxu0 0.0
        %1567 = vmatpush1.msra.mxu0 0.0
        %1568 = vmatprep.subr.mxu0 0.0
        %1569 = vmatpush1.msra.mxu0 0.0
        %1570 = vmatprep.subr.mxu0 0.0
        %1571 = vmatpush1.msra.mxu0 0.0
        %1572 = vmatprep.subr.mxu0 0.0
        %1573 = vmatpush1.msra.mxu0 0.0
        %1574 = vmatprep.subr.mxu0 0.0
        %1575 = vmatpush1.msra.mxu0 0.0
        %1576 = vmatprep.subr.mxu0 0.0
        %1577 = vmatpush1.msra.mxu0 0.0
        %1578 = vmatprep.mubr.f32.mxu0 0.0
        %1579 = vmatmul.mubr.f32.gmra.mrb[0].mxu0 %v1512
        %v1580 = vpop.f32.mrb[0].mxu0
        %v1581 = vadd.f32 0.0, %v1580
        %v1582 = vpop.f32.mrb[0].mxu0
        %1583 = vdwg.mxu0
        %v1584 = vadd.f32 %v1345, %v1581
        %v1585 = vld [vmem:[%s6] sm:$0x1]
        %v1587 = vlaneseq
        %v1588 = vshrl.u32 %v1587, 7
        %v1589 = vsub.s32 0, %v1588
        %v1590 = vrot.slane %v1585, %v1589
        %v1592 = vadd.f32 %v1584, %v1590
        %1593 = vst.msk [vmem:[%s364] sm:$0xff] %vm379, %v1592
        %s1594 = sand.u32 %s197, 1
        %s1595 = scalar_lea.sflag [#allocation4], %s1594
        %s1596 = sand.u32 %s197, 1
        %s1597 = smul.addr %s1596, 8
        %s1598 = scalar_lea.vmem [#allocation8], %s1597
        // Predicated region
        $region61: #{tpu_custom_call.1} parent=47 // pred_check
          %p1599 = pneg %p207
        $region62: #{tpu_custom_call.1} parent=47 // pred_check_branch
          %1601 = sbr.rel (%p1599) target = $region64
        $region63: #{tpu_custom_call.1} parent=47 // pred_region
          %s1603 = ssub.s32 128, 128
          %1604 = vsyncadd %s1595, %s1603
          %s1605 = smul.addr %s27, 128
          %s1606 = scalar_lea.hbm %s7, %s1605
          %s1608 = sshll.u32 %s1598, 4
          %s1609 = int_to_ptr.vmem [resolvable:$true] %s1608
          %1611 = dma.vmem_to_hbm [thread:$0]  %s1609, 128, %s1606, %s1595
        $region64: #{tpu_custom_call.1} parent=47 // pred_fallthru
          _
      $region48: #{tpu_custom_call.1} parent=5 // pred_fallthru
        _
      %p1612 = scmp.le.s32.totalorder 2, %s22
      // Predicated region
      $region65: #{tpu_custom_call.1} parent=5 // pred_check
        %p1613 = pneg %p1612
      $region66: #{tpu_custom_call.1} parent=5 // pred_check_branch
        %1615 = sbr.rel (%p1613) target = $region68
      $region67: #{tpu_custom_call.1} parent=5 // pred_region
        %s1616 = ssub.s32 %s22, 2
        // Predicated region
        $region69: #{tpu_custom_call.1} parent=67 // pred_check
          %p1617 = pneg %p213
        $region70: #{tpu_custom_call.1} parent=67 // pred_check_branch
          %1619 = sbr.rel (%p1617) target = $region72
        $region71: #{tpu_custom_call.1} parent=67 // pred_region
          %s1620 = sand.u32 %s198, 1
          %s1621 = scalar_lea.sflag [#allocation4], %s1620
          %s1622 = sand.u32 %s198, 1
          %s1623 = smul.addr %s1622, 8
          %s1624 = scalar_lea.vmem [#allocation8], %s1623
          %1625 = dma.done %s1621, 128
        $region72: #{tpu_custom_call.1} parent=67 // pred_fallthru
          _
      $region68: #{tpu_custom_call.1} parent=5 // pred_fallthru
        _
    $region6: #{tpu_custom_call.1} parent=1 // loop_footer
      %s26 = sadd.s32 1, %s22
    $region7: #{tpu_custom_call.1} parent=1 // loop_footer_branch
      %21 = sbr.rel target = $region3
    $region8: #{tpu_custom_call.1} parent=1 // loop_exit
      _
    %1626 = vsyncpa [#allocation3], 1
    %s1627 = scalar_lea.sflag [#allocation3], 1
    %1628 = vsyncpa %s1627, 1
    %1629 = vsyncpa [#allocation6], 1
    %s1630 = scalar_lea.sflag [#allocation6], 1
    %1631 = vsyncpa %s1630, 1
    %1632 = vsyncpa [#allocation4], 1
    %s1633 = scalar_lea.sflag [#allocation4], 1
    %1634 = vsyncpa %s1633, 1

</llo_original>
